<compile_context>
chip_gen: v7x
topology: tpu7x:2x2x1
jax: 0.10.0
libtpu: 0.0.40
codegen_flags: <defaults>
</compile_context>

<pallas_src>
import numpy as np
import jax
import jax.numpy as jnp
from jax.experimental import pallas as pl
from jax.experimental.pallas import tpu as pltpu


def _silu(v):
    return v * jax.nn.sigmoid(v)


def _round_up(v, m):
    return ((v + m - 1) // m) * m


# ------------------- per-layer weight slab packing -------------------
# All 15 per-layer pieces (weights, biases, cW2 stored transposed as a row) are
# packed along the row (sublane) axis of ONE [n_layers, Kp, H] slab.  Every
# piece starts at an 8-aligned row so in-kernel slices stay sublane-aligned.

_PACK_ORDER = ('eW1_hr', 'eW1_hc', 'eW1_rad', 'eW1_ea', 'eb1',
               'eW2', 'eb2', 'cW1', 'cb1', 'cW2row',
               'nW1_h', 'nW1_agg', 'nb1', 'nW2', 'nb2')


def _pack_layout(H, De):
    sizes = {'eW1_hr': H, 'eW1_hc': H, 'eW1_rad': 1, 'eW1_ea': De, 'eb1': 1,
             'eW2': H, 'eb2': 1, 'cW1': H, 'cb1': 1, 'cW2row': 1,
             'nW1_h': H, 'nW1_agg': H, 'nb1': 1, 'nW2': H, 'nb2': 1}
    offs, o = {}, 0
    for name in _PACK_ORDER:
        offs[name] = o
        o += _round_up(sizes[name], 8)
    return offs, o, sizes


def _pack_weights(params, n_layers, H, De):
    offs, Kp, sizes = _pack_layout(H, De)
    layers = []
    for i in range(n_layers):
        pieces = {
            'eW1_hr': params['eW1'][i][:H],
            'eW1_hc': params['eW1'][i][H:2 * H],
            'eW1_rad': params['eW1'][i][2 * H:2 * H + 1],
            'eW1_ea': params['eW1'][i][2 * H + 1:],
            'eb1': params['eb1'][i],
            'eW2': params['eW2'][i],
            'eb2': params['eb2'][i],
            'cW1': params['cW1'][i],
            'cb1': params['cb1'][i],
            'cW2row': params['cW2'][i].T,
            'nW1_h': params['nW1'][i][:H],
            'nW1_agg': params['nW1'][i][H:],
            'nb1': params['nb1'][i],
            'nW2': params['nW2'][i],
            'nb2': params['nb2'][i],
        }
        blocks = []
        for name in _PACK_ORDER:
            a = pieces[name].astype(jnp.float32)
            pad = _round_up(sizes[name], 8) - a.shape[0]
            if pad:
                a = jnp.concatenate([a, jnp.zeros((pad, H), jnp.float32)], 0)
            blocks.append(a)
        layers.append(jnp.concatenate(blocks, axis=0))
    return jnp.stack(layers), offs, sizes


# ----------------------------- kernel -----------------------------

def _make_kernel(H, De, E, offs, sizes, stream_weights):

    def kernel(h_ref, x_ref, selg_ref, selsc_ref, ea_ref,
               embW_ref, embb_ref, outW_ref, outb_ref, wpack_ref,
               h_out_ref, x_out_ref, h_scr, x_scr):
        f32 = jnp.float32
        layer = pl.program_id(0)

        # ---- grid step 0: input embedding, initialize carried state ----
        @pl.when(layer == 0)
        def _init():
            h_scr[...] = (jnp.dot(h_ref[...], embW_ref[...],
                                  preferred_element_type=f32) + embb_ref[...])
            x_scr[...] = x_ref[...]

        if stream_weights:
            w = wpack_ref[...]            # streamed [Kp, H] per-layer slab
        else:
            w = wpack_ref[layer]          # all-resident slab, dynamic layer index

        def blk(name):
            o = offs[name]
            return w[o:o + sizes[name], :]

        h = h_scr[...]                    # [N, H]
        x = x_scr[...]                    # [N, 3]

        # ---- fused gather: one selector matmul pulls [h | x] for both ends ----
        hx = jnp.concatenate([h, x], axis=1)                           # [N, H+3]
        g = jnp.dot(selg_ref[...], hx, preferred_element_type=f32)     # [2E, H+3]
        g_row, g_col = g[:E], g[E:]
        h_row, x_row = g_row[:, :H], g_row[:, H:]
        h_col, x_col = g_col[:, :H], g_col[:, H:]

        # ---- coord2radial (norm_diff=True) ----
        cd = x_row - x_col                                             # [E, 3]
        radial = jnp.sum(cd * cd, axis=1, keepdims=True)               # [E, 1]
        cd = cd / (jnp.sqrt(radial + 1e-8) + 1.0)

        # ---- edge MLP, first layer decomposed (no unaligned lane concat) ----
        pre = (jnp.dot(h_row, blk('eW1_hr'), preferred_element_type=f32)
               + jnp.dot(h_col, blk('eW1_hc'), preferred_element_type=f32)
               + radial * blk('eW1_rad')
               + blk('eb1'))
        if De == 1:
            pre = pre + ea_ref[...] * blk('eW1_ea')
        else:
            pre = pre + jnp.dot(ea_ref[...], blk('eW1_ea'),
                                preferred_element_type=f32)
        m = _silu(pre)
        m = _silu(jnp.dot(m, blk('eW2'), preferred_element_type=f32) + blk('eb2'))
        # TODO(synk): attention=False / edge_mask=None / node_mask=None paths only.

        # ---- coord MLP (tanh=False, agg='sum'); H->1 projection on VPU/XLU ----
        c = _silu(jnp.dot(m, blk('cW1'), preferred_element_type=f32) + blk('cb1'))
        c2 = jnp.sum(c * blk('cW2row'), axis=1, keepdims=True)         # [E, 1]
        trans = cd * c2                                                # [E, 3]

        # ---- fused scatter with host-pre-transposed selector ----
        payload = jnp.concatenate([trans, m], axis=1)                  # [E, 3+H]
        scat = jnp.dot(selsc_ref[...], payload, preferred_element_type=f32)
        x = x + scat[:, :3]
        agg = scat[:, 3:]

        # ---- node MLP (recurrent=True), first layer decomposed ----
        o1 = _silu(jnp.dot(h, blk('nW1_h'), preferred_element_type=f32)
                   + jnp.dot(agg, blk('nW1_agg'), preferred_element_type=f32)
                   + blk('nb1'))
        h = h + jnp.dot(o1, blk('nW2'), preferred_element_type=f32) + blk('nb2')

        h_scr[...] = h
        x_scr[...] = x

        # ---- last grid step: output embedding ----
        @pl.when(layer == pl.num_programs(0) - 1)
        def _final():
            h_out_ref[...] = (jnp.dot(h, outW_ref[...],
                                      preferred_element_type=f32) + outb_ref[...])
            x_out_ref[...] = x

    return kernel


# ----------------------------- wrapper -----------------------------

def egnn_forward(h, x, rows, cols, edge_attr, params, n_layers):
    N = h.shape[0]
    H = params['embW'].shape[1]
    out_nf = params['outW'].shape[1]
    De = edge_attr.shape[1]

    # pad edges to a sublane multiple (padded edges scatter into nothing:
    # out-of-range one_hot index -> all-zero selector rows/columns)
    E0 = rows.shape[0]
    E = _round_up(E0, 8)
    if E != E0:
        pad = E - E0
        rows = jnp.concatenate([rows, jnp.full((pad,), N, jnp.int32)])
        cols = jnp.concatenate([cols, jnp.full((pad,), N, jnp.int32)])
        edge_attr = jnp.concatenate(
            [edge_attr, jnp.zeros((pad, De), edge_attr.dtype)], axis=0)

    # f32 selectors built on the host: stacked gather [2E,N] (row|col) and a
    # pre-transposed scatter operator [N,E] (no per-layer cast or transpose).
    sel_row = jax.nn.one_hot(rows, N, dtype=jnp.float32)               # [E, N]
    sel_col = jax.nn.one_hot(cols, N, dtype=jnp.float32)               # [E, N]
    sel_gather = jnp.concatenate([sel_row, sel_col], axis=0)           # [2E, N]
    sel_scatter = sel_row.T                                            # [N, E]

    wpack, offs, sizes = _pack_weights(params, n_layers, H, De)
    L, Kp, _ = wpack.shape

    static_in = (h, x, sel_gather, sel_scatter, edge_attr,
                 params['embW'], params['embb'], params['outW'], params['outb'])

    # ---- VMEM budgeting (generation-aware) ----
    def _padded_bytes(shape, dtype=jnp.float32):
        s = list(shape)
        s[-1] = _round_up(s[-1], 128)
        if len(s) >= 2:
            s[-2] = _round_up(s[-2], 8)
        return int(np.prod(s)) * jnp.dtype(dtype).itemsize

    try:
        vmem_cap = int(pltpu.get_tpu_info().vmem_capacity_bytes)
    except Exception:
        vmem_cap = 64 << 20                         # conservative (v7x-sized)
    vmem_cap_use = int(vmem_cap * 0.8)              # headroom for compiler scratch

    static_bytes = sum(_padded_bytes(a.shape, a.dtype) for a in static_in)
    out_bytes = _padded_bytes((N, out_nf)) + _padded_bytes((N, 3))
    scratch_bytes = _padded_bytes((N, H)) + _padded_bytes((N, 3))
    wpack_all = _padded_bytes((L, Kp, H))
    wpack_layer = _padded_bytes((Kp, H))

    # all-layer-resident weights when they comfortably fit; else stream one
    # packed slab per grid step (single weight DMA per layer)
    resident_need = 2 * (static_bytes + wpack_all) + 2 * out_bytes + scratch_bytes
    stream_weights = resident_need > int(vmem_cap_use * 0.75)
    if stream_weights:
        need = 2 * (static_bytes + wpack_layer) + 2 * out_bytes + scratch_bytes
    else:
        need = resident_need
    vmem_limit = int(min(max(2 * need, 16 << 20), vmem_cap_use))

    def full(shape):                    # whole array, fetched once (constant index)
        return pl.BlockSpec(shape, lambda l: (0,) * len(shape))

    in_specs = [full(tuple(a.shape)) for a in static_in]
    if stream_weights:
        in_specs.append(pl.BlockSpec((None, Kp, H), lambda l: (l, 0, 0)))
    else:
        in_specs.append(full((L, Kp, H)))

    out_shape = (jax.ShapeDtypeStruct((N, out_nf), jnp.float32),
                 jax.ShapeDtypeStruct((N, 3), jnp.float32))
    out_specs = (full((N, out_nf)), full((N, 3)))

    scratch_shapes = [pltpu.VMEM((N, H), jnp.float32),   # carried h
                      pltpu.VMEM((N, 3), jnp.float32)]   # carried x

    grid_spec = pltpu.PrefetchScalarGridSpec(
        num_scalar_prefetch=0,
        grid=(n_layers,),
        in_specs=in_specs,
        out_specs=out_specs,
        scratch_shapes=scratch_shapes)

    kernel = _make_kernel(H, De, E, offs, sizes, stream_weights)

    return pl.pallas_call(
        kernel,
        out_shape=out_shape,
        grid_spec=grid_spec,
        input_output_aliases={1: 1},                     # x input -> x output
        compiler_params=pltpu.CompilerParams(
            dimension_semantics=("arbitrary",),
            vmem_limit_bytes=vmem_limit),
    )(*static_in, wpack)


# ------------------------- parameter construction -------------------------

def _torch_linear_init(key, fan_in, fan_out):
    kw, kb = jax.random.split(key)
    bound = 1.0 / (fan_in ** 0.5)
    W = jax.random.uniform(kw, (fan_in, fan_out), jnp.float32, -bound, bound)
    b = jax.random.uniform(kb, (1, fan_out), jnp.float32, -bound, bound)
    return W, b


def make_params(key, in_node_nf, in_edge_nf, hidden_nf, out_node_nf, n_layers):
    H = hidden_nf
    keys = iter(jax.random.split(key, 2 + 6 * n_layers))
    embW, embb = _torch_linear_init(next(keys), in_node_nf, H)
    outW, outb = _torch_linear_init(next(keys), H, out_node_nf)

    names = ['eW1', 'eb1', 'eW2', 'eb2', 'cW1', 'cb1', 'cW2',
             'nW1', 'nb1', 'nW2', 'nb2']
    stacks = {n: [] for n in names}
    edge_in = 2 * H + 1 + in_edge_nf
    for _ in range(n_layers):
        W1, b1 = _torch_linear_init(next(keys), edge_in, H)           # edge_mlp[0]
        stacks['eW1'].append(W1); stacks['eb1'].append(b1)
        W2, b2 = _torch_linear_init(next(keys), H, H)                 # edge_mlp[2]
        stacks['eW2'].append(W2); stacks['eb2'].append(b2)
        cW1, cb1 = _torch_linear_init(next(keys), H, H)               # coord_mlp[0]
        stacks['cW1'].append(cW1); stacks['cb1'].append(cb1)
        bound = 0.001 * (6.0 / (H + 1)) ** 0.5                        # xavier_uniform, gain=0.001
        cW2 = jax.random.uniform(next(keys), (H, 1), jnp.float32, -bound, bound)
        stacks['cW2'].append(cW2)
        nW1, nb1 = _torch_linear_init(next(keys), 2 * H, H)           # node_mlp[0]
        stacks['nW1'].append(nW1); stacks['nb1'].append(nb1)
        nW2, nb2 = _torch_linear_init(next(keys), H, H)               # node_mlp[2]
        stacks['nW2'].append(nW2); stacks['nb2'].append(nb2)

    params = {'embW': embW, 'embb': embb, 'outW': outW, 'outb': outb}
    for n in names:
        params[n] = jnp.stack(stacks[n])
    return params


# ------------------------- pure-JAX reference -------------------------

def egnn_reference(h, x, rows, cols, edge_attr, params, n_layers):
    silu = jax.nn.silu
    h = h @ params['embW'] + params['embb']
    N = h.shape[0]
    for i in range(n_layers):
        cd = x[rows] - x[cols]
        radial = jnp.sum(cd ** 2, axis=1, keepdims=True)
        cd = cd / (jnp.sqrt(radial + 1e-8) + 1.0)
        e_in = jnp.concatenate([h[rows], h[cols], radial, edge_attr], axis=1)
        m = silu(e_in @ params['eW1'][i] + params['eb1'][i])
        m = silu(m @ params['eW2'][i] + params['eb2'][i])
        c = silu(m @ params['cW1'][i] + params['cb1'][i]) @ params['cW2'][i]
        x = x + jax.ops.segment_sum(cd * c, rows, num_segments=N)
        agg = jax.ops.segment_sum(m, rows, num_segments=N)
        n_in = jnp.concatenate([h, agg], axis=1)
        h = h + (silu(n_in @ params['nW1'][i] + params['nb1'][i]) @ params['nW2'][i]
                 + params['nb2'][i])
    h = h @ params['outW'] + params['outb']
    return h, x


if __name__ == "__main__":
    N_NODES = 8
    IN_NODE_NF = 4
    IN_EDGE_NF = 1
    HIDDEN_NF = 32
    OUT_NODE_NF = 4          # defaults to in_node_nf in the module
    N_LAYERS = 4

    key = jax.random.PRNGKey(0)
    k_h, k_x, k_e, k_p = jax.random.split(key, 4)

    # fully-connected graph without self loops (the usual EGNN edge set)
    rows = jnp.array([i for i in range(N_NODES) for j in range(N_NODES) if i != j],
                     dtype=jnp.int32)
    cols = jnp.array([j for i in range(N_NODES) for j in range(N_NODES) if i != j],
                     dtype=jnp.int32)
    E = rows.shape[0]

    h = jax.random.normal(k_h, (N_NODES, IN_NODE_NF), jnp.float32)
    x = jax.random.normal(k_x, (N_NODES, 3), jnp.float32)
    edge_attr = jax.random.normal(k_e, (E, IN_EDGE_NF), jnp.float32)

    params = make_params(k_p, IN_NODE_NF, IN_EDGE_NF, HIDDEN_NF, OUT_NODE_NF, N_LAYERS)

    # reference first (the kernel aliases the x input buffer to the x output)
    h_ref_out, x_ref_out = egnn_reference(h, x, rows, cols, edge_attr, params, N_LAYERS)
    jax.block_until_ready((h_ref_out, x_ref_out))

    h_out, x_out = egnn_forward(h, x, rows, cols, edge_attr, params, N_LAYERS)
    jax.block_until_ready((h_out, x_out))

    np.testing.assert_allclose(np.asarray(h_out), np.asarray(h_ref_out),
                               rtol=5e-3, atol=5e-3)
    np.testing.assert_allclose(np.asarray(x_out), np.asarray(x_ref_out),
                               rtol=5e-3, atol=5e-3)

    print("KERNEL_OK")
</pallas_src>

<mosaic_0001>
module attributes {stable_mosaic.version = 11 : i64} {
  func.func @kernel(%arg0: i32, %arg1: memref<8x4xf32, #tpu.memory_space<vmem>>, %arg2: memref<8x3xf32, #tpu.memory_space<vmem>>, %arg3: memref<112x8xf32, #tpu.memory_space<vmem>>, %arg4: memref<8x56xf32, #tpu.memory_space<vmem>>, %arg5: memref<56x1xf32, #tpu.memory_space<vmem>>, %arg6: memref<4x32xf32, #tpu.memory_space<vmem>>, %arg7: memref<1x32xf32, #tpu.memory_space<vmem>>, %arg8: memref<32x4xf32, #tpu.memory_space<vmem>>, %arg9: memref<1x4xf32, #tpu.memory_space<vmem>>, %arg10: memref<4x288x32xf32, #tpu.memory_space<vmem>>, %arg11: memref<8x4xf32, #tpu.memory_space<vmem>>, %arg12: memref<8x3xf32, #tpu.memory_space<vmem>>, %arg13: memref<8x32xf32, #tpu.memory_space<vmem>>, %arg14: memref<8x3xf32, #tpu.memory_space<vmem>>) attributes {dimension_semantics = [#tpu.dimension_semantics<arbitrary>], iteration_bounds = array<i64: 4>, scalar_prefetch = 0 : i64, scratch_operands = 2 : i64, tpu.core_type = #tpu.core_type<tc>, window_params = [{pipeline_mode = #tpu.pipeline_mode<synchronous>, transform_indices = @transform_0, window_bounds = array<i64: 8, 4>}, {pipeline_mode = #tpu.pipeline_mode<synchronous>, transform_indices = @transform_1, window_bounds = array<i64: 8, 3>}, {pipeline_mode = #tpu.pipeline_mode<synchronous>, transform_indices = @transform_2, window_bounds = array<i64: 112, 8>}, {pipeline_mode = #tpu.pipeline_mode<synchronous>, transform_indices = @transform_3, window_bounds = array<i64: 8, 56>}, {pipeline_mode = #tpu.pipeline_mode<synchronous>, transform_indices = @transform_4, window_bounds = array<i64: 56, 1>}, {pipeline_mode = #tpu.pipeline_mode<synchronous>, transform_indices = @transform_5, window_bounds = array<i64: 4, 32>}, {pipeline_mode = #tpu.pipeline_mode<synchronous>, transform_indices = @transform_6, window_bounds = array<i64: 1, 32>}, {pipeline_mode = #tpu.pipeline_mode<synchronous>, transform_indices = @transform_7, window_bounds = array<i64: 32, 4>}, {pipeline_mode = #tpu.pipeline_mode<synchronous>, transform_indices = @transform_8, window_bounds = array<i64: 1, 4>}, {pipeline_mode = #tpu.pipeline_mode<synchronous>, transform_indices = @transform_9, window_bounds = array<i64: 4, 288, 32>}, {pipeline_mode = #tpu.pipeline_mode<synchronous>, transform_indices = @transform_10, window_bounds = array<i64: 8, 4>}, {pipeline_mode = #tpu.pipeline_mode<synchronous>, transform_indices = @transform_11, window_bounds = array<i64: 8, 3>}]} {
    %c0_i32 = arith.constant 0 : i32
    %0 = arith.cmpi eq, %arg0, %c0_i32 : i32
    %1 = arith.extui %0 : i1 to i32
    %c0_i32_0 = arith.constant 0 : i32
    %2 = arith.cmpi ne, %1, %c0_i32_0 : i32
    scf.if %2 {
      %c0_33 = arith.constant 0 : index
      %c0_34 = arith.constant 0 : index
      %113 = vector.load %arg1[%c0_33, %c0_34] : memref<8x4xf32, #tpu.memory_space<vmem>>, vector<8x4xf32>
      %c0_35 = arith.constant 0 : index
      %c0_36 = arith.constant 0 : index
      %114 = vector.load %arg6[%c0_35, %c0_36] : memref<4x32xf32, #tpu.memory_space<vmem>>, vector<4x32xf32>
      %cst_37 = arith.constant dense<0.000000e+00> : vector<8x32xf32>
      %115 = tpu.matmul %113, %114, %cst_37 {dimension_numbers = #tpu.dot_dimension_numbers<[1], [0], [0], [1], [0, 0, 1, 1], [], []>} : vector<8x4xf32>, vector<4x32xf32>, vector<8x32xf32> -> vector<8x32xf32>
      %c0_38 = arith.constant 0 : index
      %c0_39 = arith.constant 0 : index
      %116 = vector.load %arg7[%c0_38, %c0_39] : memref<1x32xf32, #tpu.memory_space<vmem>>, vector<1x32xf32>
      %117 = vector.broadcast %116 : vector<1x32xf32> to vector<8x32xf32>
      %118 = arith.addf %115, %117 : vector<8x32xf32>
      %c0_40 = arith.constant 0 : index
      %c0_41 = arith.constant 0 : index
      %119 = vector.load %arg13[%c0_40, %c0_41] : memref<8x32xf32, #tpu.memory_space<vmem>>, vector<8x32xf32>
      tpu.vector_store %arg13[%c0_40, %c0_41], %118 {strides = array<i32>} : memref<8x32xf32, #tpu.memory_space<vmem>>, vector<8x32xf32>,
      %c0_42 = arith.constant 0 : index
      %c0_43 = arith.constant 0 : index
      %120 = vector.load %arg2[%c0_42, %c0_43] : memref<8x3xf32, #tpu.memory_space<vmem>>, vector<8x3xf32>
      %c0_44 = arith.constant 0 : index
      %c0_45 = arith.constant 0 : index
      %121 = vector.load %arg14[%c0_44, %c0_45] : memref<8x3xf32, #tpu.memory_space<vmem>>, vector<8x3xf32>
      tpu.vector_store %arg14[%c0_44, %c0_45], %120 {strides = array<i32>} : memref<8x3xf32, #tpu.memory_space<vmem>>, vector<8x3xf32>,
    } else {
    }
    %3 = arith.index_cast %arg0 : i32 to index
    %c0 = arith.constant 0 : index
    %c0_1 = arith.constant 0 : index
    %4 = vector.load %arg10[%3, %c0, %c0_1] : memref<4x288x32xf32, #tpu.memory_space<vmem>>, vector<1x288x32xf32>
    %5 = vector.shape_cast %4 : vector<1x288x32xf32> to vector<288x32xf32>
    %c0_2 = arith.constant 0 : index
    %c0_3 = arith.constant 0 : index
    %6 = vector.load %arg13[%c0_2, %c0_3] : memref<8x32xf32, #tpu.memory_space<vmem>>, vector<8x32xf32>
    %c0_4 = arith.constant 0 : index
    %c0_5 = arith.constant 0 : index
    %7 = vector.load %arg14[%c0_4, %c0_5] : memref<8x3xf32, #tpu.memory_space<vmem>>, vector<8x3xf32>
    %8 = tpu.concatenate %6, %7 in 1 : vector<8x32xf32>, vector<8x3xf32> -> vector<8x35xf32>
    %c0_6 = arith.constant 0 : index
    %c0_7 = arith.constant 0 : index
    %9 = vector.load %arg3[%c0_6, %c0_7] : memref<112x8xf32, #tpu.memory_space<vmem>>, vector<112x8xf32>
    %cst = arith.constant dense<0.000000e+00> : vector<112x35xf32>
    %10 = tpu.matmul %9, %8, %cst {dimension_numbers = #tpu.dot_dimension_numbers<[1], [0], [0], [1], [0, 0, 1, 1], [], []>} : vector<112x8xf32>, vector<8x35xf32>, vector<112x35xf32> -> vector<112x35xf32>
    %11 = vector.extract_strided_slice %10 {offsets = [0, 0], sizes = [56, 35], strides = [1, 1]} : vector<112x35xf32> to vector<56x35xf32>
    %12 = vector.extract_strided_slice %10 {offsets = [56, 0], sizes = [56, 35], strides = [1, 1]} : vector<112x35xf32> to vector<56x35xf32>
    %13 = vector.extract_strided_slice %11 {offsets = [0, 0], sizes = [56, 32], strides = [1, 1]} : vector<56x35xf32> to vector<56x32xf32>
    %14 = vector.extract_strided_slice %11 {offsets = [0, 32], sizes = [56, 3], strides = [1, 1]} : vector<56x35xf32> to vector<56x3xf32>
    %15 = vector.extract_strided_slice %12 {offsets = [0, 0], sizes = [56, 32], strides = [1, 1]} : vector<56x35xf32> to vector<56x32xf32>
    %16 = vector.extract_strided_slice %12 {offsets = [0, 32], sizes = [56, 3], strides = [1, 1]} : vector<56x35xf32> to vector<56x3xf32>
    %17 = arith.subf %14, %16 : vector<56x3xf32>
    %18 = arith.mulf %17, %17 : vector<56x3xf32>
    %cst_8 = arith.constant dense<0.000000e+00> : vector<56xf32>
    %19 = vector.multi_reduction <add>, %18, %cst_8 [1] : vector<56x3xf32> to vector<56xf32>
    %20 = vector.shape_cast %19 : vector<56xf32> to vector<56x1xf32>
    %cst_9 = arith.constant 9.99999993E-9 : f32
    %21 = vector.broadcast %cst_9 : f32 to vector<56x1xf32>
    %22 = arith.addf %20, %21 : vector<56x1xf32>
    %23 = math.sqrt %22 : vector<56x1xf32>
    %cst_10 = arith.constant 1.000000e+00 : f32
    %24 = vector.broadcast %cst_10 : f32 to vector<56x1xf32>
    %25 = arith.addf %23, %24 : vector<56x1xf32>
    %26 = vector.broadcast %25 : vector<56x1xf32> to vector<56x3xf32>
    %27 = arith.divf %17, %26 : vector<56x3xf32>
    %28 = vector.extract_strided_slice %5 {offsets = [0, 0], sizes = [32, 32], strides = [1, 1]} : vector<288x32xf32> to vector<32x32xf32>
    %cst_11 = arith.constant dense<0.000000e+00> : vector<56x32xf32>
    %29 = tpu.matmul %13, %28, %cst_11 {dimension_numbers = #tpu.dot_dimension_numbers<[1], [0], [0], [1], [0, 0, 1, 1], [], []>} : vector<56x32xf32>, vector<32x32xf32>, vector<56x32xf32> -> vector<56x32xf32>
    %30 = vector.extract_strided_slice %5 {offsets = [32, 0], sizes = [32, 32], strides = [1, 1]} : vector<288x32xf32> to vector<32x32xf32>
    %cst_12 = arith.constant dense<0.000000e+00> : vector<56x32xf32>
    %31 = tpu.matmul %15, %30, %cst_12 {dimension_numbers = #tpu.dot_dimension_numbers<[1], [0], [0], [1], [0, 0, 1, 1], [], []>} : vector<56x32xf32>, vector<32x32xf32>, vector<56x32xf32> -> vector<56x32xf32>
    %32 = arith.addf %29, %31 : vector<56x32xf32>
    %33 = vector.extract_strided_slice %5 {offsets = [64, 0], sizes = [1, 32], strides = [1, 1]} : vector<288x32xf32> to vector<1x32xf32>
    %34 = vector.broadcast %20 : vector<56x1xf32> to vector<56x32xf32>
    %35 = vector.broadcast %33 : vector<1x32xf32> to vector<56x32xf32>
    %36 = arith.mulf %34, %35 : vector<56x32xf32>
    %37 = arith.addf %32, %36 : vector<56x32xf32>
    %38 = vector.extract_strided_slice %5 {offsets = [80, 0], sizes = [1, 32], strides = [1, 1]} : vector<288x32xf32> to vector<1x32xf32>
    %39 = vector.broadcast %38 : vector<1x32xf32> to vector<56x32xf32>
    %40 = arith.addf %37, %39 : vector<56x32xf32>
    %c0_13 = arith.constant 0 : index
    %c0_14 = arith.constant 0 : index
    %41 = vector.load %arg5[%c0_13, %c0_14] : memref<56x1xf32, #tpu.memory_space<vmem>>, vector<56x1xf32>
    %42 = vector.extract_strided_slice %5 {offsets = [72, 0], sizes = [1, 32], strides = [1, 1]} : vector<288x32xf32> to vector<1x32xf32>
    %43 = vector.broadcast %41 : vector<56x1xf32> to vector<56x32xf32>
    %44 = vector.broadcast %42 : vector<1x32xf32> to vector<56x32xf32>
    %45 = arith.mulf %43, %44 : vector<56x32xf32>
    %46 = arith.addf %40, %45 : vector<56x32xf32>
    %47 = arith.negf %46 : vector<56x32xf32>
    %48 = math.exp %47 : vector<56x32xf32>
    %cst_15 = arith.constant 1.000000e+00 : f32
    %49 = vector.broadcast %cst_15 : f32 to vector<56x32xf32>
    %50 = arith.addf %49, %48 : vector<56x32xf32>
    %51 = arith.divf %49, %50 : vector<56x32xf32>
    %52 = arith.mulf %46, %51 : vector<56x32xf32>
    %53 = vector.extract_strided_slice %5 {offsets = [88, 0], sizes = [32, 32], strides = [1, 1]} : vector<288x32xf32> to vector<32x32xf32>
    %cst_16 = arith.constant dense<0.000000e+00> : vector<56x32xf32>
    %54 = tpu.matmul %52, %53, %cst_16 {dimension_numbers = #tpu.dot_dimension_numbers<[1], [0], [0], [1], [0, 0, 1, 1], [], []>} : vector<56x32xf32>, vector<32x32xf32>, vector<56x32xf32> -> vector<56x32xf32>
    %55 = vector.extract_strided_slice %5 {offsets = [120, 0], sizes = [1, 32], strides = [1, 1]} : vector<288x32xf32> to vector<1x32xf32>
    %56 = vector.broadcast %55 : vector<1x32xf32> to vector<56x32xf32>
    %57 = arith.addf %54, %56 : vector<56x32xf32>
    %58 = arith.negf %57 : vector<56x32xf32>
    %59 = math.exp %58 : vector<56x32xf32>
    %cst_17 = arith.constant 1.000000e+00 : f32
    %60 = vector.broadcast %cst_17 : f32 to vector<56x32xf32>
    %61 = arith.addf %60, %59 : vector<56x32xf32>
    %62 = arith.divf %60, %61 : vector<56x32xf32>
    %63 = arith.mulf %57, %62 : vector<56x32xf32>
    %64 = vector.extract_strided_slice %5 {offsets = [128, 0], sizes = [32, 32], strides = [1, 1]} : vector<288x32xf32> to vector<32x32xf32>
    %cst_18 = arith.constant dense<0.000000e+00> : vector<56x32xf32>
    %65 = tpu.matmul %63, %64, %cst_18 {dimension_numbers = #tpu.dot_dimension_numbers<[1], [0], [0], [1], [0, 0, 1, 1], [], []>} : vector<56x32xf32>, vector<32x32xf32>, vector<56x32xf32> -> vector<56x32xf32>
    %66 = vector.extract_strided_slice %5 {offsets = [160, 0], sizes = [1, 32], strides = [1, 1]} : vector<288x32xf32> to vector<1x32xf32>
    %67 = vector.broadcast %66 : vector<1x32xf32> to vector<56x32xf32>
    %68 = arith.addf %65, %67 : vector<56x32xf32>
    %69 = arith.negf %68 : vector<56x32xf32>
    %70 = math.exp %69 : vector<56x32xf32>
    %cst_19 = arith.constant 1.000000e+00 : f32
    %71 = vector.broadcast %cst_19 : f32 to vector<56x32xf32>
    %72 = arith.addf %71, %70 : vector<56x32xf32>
    %73 = arith.divf %71, %72 : vector<56x32xf32>
    %74 = arith.mulf %68, %73 : vector<56x32xf32>
    %75 = vector.extract_strided_slice %5 {offsets = [168, 0], sizes = [1, 32], strides = [1, 1]} : vector<288x32xf32> to vector<1x32xf32>
    %76 = vector.broadcast %75 : vector<1x32xf32> to vector<56x32xf32>
    %77 = arith.mulf %74, %76 : vector<56x32xf32>
    %cst_20 = arith.constant dense<0.000000e+00> : vector<56xf32>
    %78 = vector.multi_reduction <add>, %77, %cst_20 [1] : vector<56x32xf32> to vector<56xf32>
    %79 = vector.shape_cast %78 : vector<56xf32> to vector<56x1xf32>
    %80 = vector.broadcast %79 : vector<56x1xf32> to vector<56x3xf32>
    %81 = arith.mulf %27, %80 : vector<56x3xf32>
    %82 = tpu.concatenate %81, %63 in 1 : vector<56x3xf32>, vector<56x32xf32> -> vector<56x35xf32>
    %c0_21 = arith.constant 0 : index
    %c0_22 = arith.constant 0 : index
    %83 = vector.load %arg4[%c0_21, %c0_22] : memref<8x56xf32, #tpu.memory_space<vmem>>, vector<8x56xf32>
    %cst_23 = arith.constant dense<0.000000e+00> : vector<8x35xf32>
    %84 = tpu.matmul %83, %82, %cst_23 {dimension_numbers = #tpu.dot_dimension_numbers<[1], [0], [0], [1], [0, 0, 1, 1], [], []>} : vector<8x56xf32>, vector<56x35xf32>, vector<8x35xf32> -> vector<8x35xf32>
    %85 = vector.extract_strided_slice %84 {offsets = [0, 0], sizes = [8, 3], strides = [1, 1]} : vector<8x35xf32> to vector<8x3xf32>
    %86 = arith.addf %7, %85 : vector<8x3xf32>
    %87 = vector.extract_strided_slice %84 {offsets = [0, 3], sizes = [8, 32], strides = [1, 1]} : vector<8x35xf32> to vector<8x32xf32>
    %88 = vector.extract_strided_slice %5 {offsets = [176, 0], sizes = [32, 32], strides = [1, 1]} : vector<288x32xf32> to vector<32x32xf32>
    %cst_24 = arith.constant dense<0.000000e+00> : vector<8x32xf32>
    %89 = tpu.matmul %6, %88, %cst_24 {dimension_numbers = #tpu.dot_dimension_numbers<[1], [0], [0], [1], [0, 0, 1, 1], [], []>} : vector<8x32xf32>, vector<32x32xf32>, vector<8x32xf32> -> vector<8x32xf32>
    %90 = vector.extract_strided_slice %5 {offsets = [208, 0], sizes = [32, 32], strides = [1, 1]} : vector<288x32xf32> to vector<32x32xf32>
    %cst_25 = arith.constant dense<0.000000e+00> : vector<8x32xf32>
    %91 = tpu.matmul %87, %90, %cst_25 {dimension_numbers = #tpu.dot_dimension_numbers<[1], [0], [0], [1], [0, 0, 1, 1], [], []>} : vector<8x32xf32>, vector<32x32xf32>, vector<8x32xf32> -> vector<8x32xf32>
    %92 = arith.addf %89, %91 : vector<8x32xf32>
    %93 = vector.extract_strided_slice %5 {offsets = [240, 0], sizes = [1, 32], strides = [1, 1]} : vector<288x32xf32> to vector<1x32xf32>
    %94 = vector.broadcast %93 : vector<1x32xf32> to vector<8x32xf32>
    %95 = arith.addf %92, %94 : vector<8x32xf32>
    %96 = arith.negf %95 : vector<8x32xf32>
    %97 = math.exp %96 : vector<8x32xf32>
    %cst_26 = arith.constant 1.000000e+00 : f32
    %98 = vector.broadcast %cst_26 : f32 to vector<8x32xf32>
    %99 = arith.addf %98, %97 : vector<8x32xf32>
    %100 = arith.divf %98, %99 : vector<8x32xf32>
    %101 = arith.mulf %95, %100 : vector<8x32xf32>
    %102 = vector.extract_strided_slice %5 {offsets = [248, 0], sizes = [32, 32], strides = [1, 1]} : vector<288x32xf32> to vector<32x32xf32>
    %cst_27 = arith.constant dense<0.000000e+00> : vector<8x32xf32>
    %103 = tpu.matmul %101, %102, %cst_27 {dimension_numbers = #tpu.dot_dimension_numbers<[1], [0], [0], [1], [0, 0, 1, 1], [], []>} : vector<8x32xf32>, vector<32x32xf32>, vector<8x32xf32> -> vector<8x32xf32>
    %104 = arith.addf %6, %103 : vector<8x32xf32>
    %105 = vector.extract_strided_slice %5 {offsets = [280, 0], sizes = [1, 32], strides = [1, 1]} : vector<288x32xf32> to vector<1x32xf32>
    %106 = vector.broadcast %105 : vector<1x32xf32> to vector<8x32xf32>
    %107 = arith.addf %104, %106 : vector<8x32xf32>
    %c0_28 = arith.constant 0 : index
    %c0_29 = arith.constant 0 : index
    %108 = vector.load %arg13[%c0_28, %c0_29] : memref<8x32xf32, #tpu.memory_space<vmem>>, vector<8x32xf32>
    tpu.vector_store %arg13[%c0_28, %c0_29], %107 {strides = array<i32>} : memref<8x32xf32, #tpu.memory_space<vmem>>, vector<8x32xf32>,
    %c0_30 = arith.constant 0 : index
    %c0_31 = arith.constant 0 : index
    %109 = vector.load %arg14[%c0_30, %c0_31] : memref<8x3xf32, #tpu.memory_space<vmem>>, vector<8x3xf32>
    tpu.vector_store %arg14[%c0_30, %c0_31], %86 {strides = array<i32>} : memref<8x3xf32, #tpu.memory_space<vmem>>, vector<8x3xf32>,
    %c3_i32 = arith.constant 3 : i32
    %110 = arith.cmpi eq, %arg0, %c3_i32 : i32
    %111 = arith.extui %110 : i1 to i32
    %c0_i32_32 = arith.constant 0 : i32
    %112 = arith.cmpi ne, %111, %c0_i32_32 : i32
    scf.if %112 {
      %c0_33 = arith.constant 0 : index
      %c0_34 = arith.constant 0 : index
      %113 = vector.load %arg8[%c0_33, %c0_34] : memref<32x4xf32, #tpu.memory_space<vmem>>, vector<32x4xf32>
      %cst_35 = arith.constant dense<0.000000e+00> : vector<8x4xf32>
      %114 = tpu.matmul %107, %113, %cst_35 {dimension_numbers = #tpu.dot_dimension_numbers<[1], [0], [0], [1], [0, 0, 1, 1], [], []>} : vector<8x32xf32>, vector<32x4xf32>, vector<8x4xf32> -> vector<8x4xf32>
      %c0_36 = arith.constant 0 : index
      %c0_37 = arith.constant 0 : index
      %115 = vector.load %arg9[%c0_36, %c0_37] : memref<1x4xf32, #tpu.memory_space<vmem>>, vector<1x4xf32>
      %116 = vector.broadcast %115 : vector<1x4xf32> to vector<8x4xf32>
      %117 = arith.addf %114, %116 : vector<8x4xf32>
      %c0_38 = arith.constant 0 : index
      %c0_39 = arith.constant 0 : index
      %118 = vector.load %arg11[%c0_38, %c0_39] : memref<8x4xf32, #tpu.memory_space<vmem>>, vector<8x4xf32>
      tpu.vector_store %arg11[%c0_38, %c0_39], %117 {strides = array<i32>} : memref<8x4xf32, #tpu.memory_space<vmem>>, vector<8x4xf32>,
      %c0_40 = arith.constant 0 : index
      %c0_41 = arith.constant 0 : index
      %119 = vector.load %arg12[%c0_40, %c0_41] : memref<8x3xf32, #tpu.memory_space<vmem>>, vector<8x3xf32>
      tpu.vector_store %arg12[%c0_40, %c0_41], %86 {strides = array<i32>} : memref<8x3xf32, #tpu.memory_space<vmem>>, vector<8x3xf32>,
    } else {
    }
    return
  }
  func.func @transform_0(%arg0: i32) -> (i32, i32) {
    %c0_i32 = arith.constant 0 : i32
    %c0_i32_0 = arith.constant 0 : i32
    %c0_i32_1 = arith.constant 0 : i32
    return %c0_i32, %c0_i32_0 : i32, i32
  }
  func.func @transform_1(%arg0: i32) -> (i32, i32) {
    %c0_i32 = arith.constant 0 : i32
    %c0_i32_0 = arith.constant 0 : i32
    %c0_i32_1 = arith.constant 0 : i32
    return %c0_i32, %c0_i32_0 : i32, i32
  }
  func.func @transform_2(%arg0: i32) -> (i32, i32) {
    %c0_i32 = arith.constant 0 : i32
    %c0_i32_0 = arith.constant 0 : i32
    %c0_i32_1 = arith.constant 0 : i32
    return %c0_i32, %c0_i32_0 : i32, i32
  }
  func.func @transform_3(%arg0: i32) -> (i32, i32) {
    %c0_i32 = arith.constant 0 : i32
    %c0_i32_0 = arith.constant 0 : i32
    %c0_i32_1 = arith.constant 0 : i32
    return %c0_i32, %c0_i32_0 : i32, i32
  }
  func.func @transform_4(%arg0: i32) -> (i32, i32) {
    %c0_i32 = arith.constant 0 : i32
    %c0_i32_0 = arith.constant 0 : i32
    %c0_i32_1 = arith.constant 0 : i32
    return %c0_i32, %c0_i32_0 : i32, i32
  }
  func.func @transform_5(%arg0: i32) -> (i32, i32) {
    %c0_i32 = arith.constant 0 : i32
    %c0_i32_0 = arith.constant 0 : i32
    %c0_i32_1 = arith.constant 0 : i32
    return %c0_i32, %c0_i32_0 : i32, i32
  }
  func.func @transform_6(%arg0: i32) -> (i32, i32) {
    %c0_i32 = arith.constant 0 : i32
    %c0_i32_0 = arith.constant 0 : i32
    %c0_i32_1 = arith.constant 0 : i32
    return %c0_i32, %c0_i32_0 : i32, i32
  }
  func.func @transform_7(%arg0: i32) -> (i32, i32) {
    %c0_i32 = arith.constant 0 : i32
    %c0_i32_0 = arith.constant 0 : i32
    %c0_i32_1 = arith.constant 0 : i32
    return %c0_i32, %c0_i32_0 : i32, i32
  }
  func.func @transform_8(%arg0: i32) -> (i32, i32) {
    %c0_i32 = arith.constant 0 : i32
    %c0_i32_0 = arith.constant 0 : i32
    %c0_i32_1 = arith.constant 0 : i32
    return %c0_i32, %c0_i32_0 : i32, i32
  }
  func.func @transform_9(%arg0: i32) -> (i32, i32, i32) {
    %c0_i32 = arith.constant 0 : i32
    %c0_i32_0 = arith.constant 0 : i32
    %c0_i32_1 = arith.constant 0 : i32
    %c0_i32_2 = arith.constant 0 : i32
    return %c0_i32, %c0_i32_0, %c0_i32_1 : i32, i32, i32
  }
  func.func @transform_10(%arg0: i32) -> (i32, i32) {
    %c0_i32 = arith.constant 0 : i32
    %c0_i32_0 = arith.constant 0 : i32
    %c0_i32_1 = arith.constant 0 : i32
    return %c0_i32, %c0_i32_0 : i32, i32
  }
  func.func @transform_11(%arg0: i32) -> (i32, i32) {
    %c0_i32 = arith.constant 0 : i32
    %c0_i32_0 = arith.constant 0 : i32
    %c0_i32_1 = arith.constant 0 : i32
    return %c0_i32, %c0_i32_0 : i32, i32
  }
}

</mosaic_0001>

<llo_original>
// kernel: tpu_custom_call.1
$region0: #{tpu_custom_call.1}
  #allocation0 [shape = 'u32[]', space=smem, size = 0x4, offset = 0x4, fixed_abs, tag = 'smem constant byte address 0x4 - core index']
  #allocation1 [shape = 'u32[144,128]{1,0:T(1,128)}', space=vmem, size = 0x12000, scoped, tag = 'internal scratch']
  #allocation2 [shape = 'f32[8,32]{1,0:T(8,128)}', space=vmem, size = 0x1000, scoped, tag = 'scratch operand']
  #allocation3 [shape = 'f32[8,3]{1,0:T(8,128)}', space=vmem, size = 0x1000, scoped, tag = 'scratch operand']
  %s0 = inlined_call_operand.vmem [shape: f32[8,4], index: 0, kind: input, shape index: {}]
  %s1 = inlined_call_operand.vmem [shape: f32[8,3], index: 1, kind: input, shape index: {}, may-alias: {1,11}]
  %s2 = inlined_call_operand.vmem [shape: f32[112,8], index: 2, kind: input, shape index: {}]
  %s3 = inlined_call_operand.vmem [shape: f32[8,56], index: 3, kind: input, shape index: {}]
  %s4 = inlined_call_operand.vmem [shape: f32[56,1], index: 4, kind: input, shape index: {}]
  %s5 = inlined_call_operand.vmem [shape: f32[4,32], index: 5, kind: input, shape index: {}]
  %s6 = inlined_call_operand.vmem [shape: f32[1,32], index: 6, kind: input, shape index: {}]
  %s7 = inlined_call_operand.vmem [shape: f32[32,4], index: 7, kind: input, shape index: {}]
  %s8 = inlined_call_operand.vmem [shape: f32[1,4], index: 8, kind: input, shape index: {}]
  %s9 = inlined_call_operand.vmem [shape: f32[4,288,32], index: 9, kind: input, shape index: {}]
  %s10 = inlined_call_operand.vmem [shape: f32[8,4], index: 10, kind: output, shape index: {0}]
  %s11 = inlined_call_operand.vmem [shape: f32[8,3], index: 11, kind: output, shape index: {1}, may-alias: {1,11}]
  %12 = xla_tuple %s10, %s11
  %s13 = sld [smem:[#allocation0]]
  $region89: #{tpu_custom_call.1} parent=0
    _
  %s15 = ssub.s32 1, %s13
  %s16 = scalar_select 0, %s15, %s13
  loop: start=0, step=1, limit=6
  $region2: #{tpu_custom_call.1} parent=0 // loop_pre_header
    _
  $region3: #{tpu_custom_call.1} parent=0 // loop_header
    %s18 = sphi 0, %s22
    %p19 = scmp.ge.s32.totalorder %s18, 6
    %s26 = sphi 0, %s26
    %s28 = sphi 0, %s26
    %s29 = sphi 0, %s28
    %s43 = sphi 0, %s29
    %s47 = sphi 0, %s47
    %s49 = sphi 0, %s47
    %s50 = sphi 0, %s49
    %s64 = sphi 0, %s50
    %s68 = sphi 0, %s68
    %s70 = sphi 0, %s68
    %s71 = sphi 0, %s70
    %s85 = sphi 0, %s71
    %s89 = sphi 0, %s89
    %s91 = sphi 0, %s89
    %s92 = sphi 0, %s91
    %s106 = sphi 0, %s92
    %s110 = sphi 0, %s110
    %s112 = sphi 0, %s110
    %s113 = sphi 0, %s112
    %s127 = sphi 0, %s113
    %s131 = sphi 0, %s131
    %s133 = sphi 0, %s131
    %s134 = sphi 0, %s133
    %s148 = sphi 0, %s134
    %s152 = sphi 0, %s152
    %s154 = sphi 0, %s152
    %s155 = sphi 0, %s154
    %s169 = sphi 0, %s155
    %s173 = sphi 0, %s173
    %s175 = sphi 0, %s173
    %s176 = sphi 0, %s175
    %s190 = sphi 0, %s176
    %s194 = sphi 0, %s194
    %s196 = sphi 0, %s194
    %s197 = sphi 0, %s196
    %s211 = sphi 0, %s197
    %s215 = sphi 0, %s215
    %s217 = sphi 0, %s215
    %s218 = sphi 0, %s217
    %s232 = sphi 0, %s218
    %s236 = sphi 0, %s236
    %s238 = sphi 0, %s236
    %s239 = sphi 0, %s238
    %s253 = sphi 0, %s239
    %s257 = sphi 0, %s257
    %s259 = sphi 0, %s257
    %s260 = sphi 0, %s259
    %s274 = sphi 0, %s260
  $region4: #{tpu_custom_call.1} parent=0 // loop_header_branch
    %21 = sbr.rel (%p19) target = $region8
  $region5: #{tpu_custom_call.1} parent=0 // loop_body
    %s23 = ssub.s32 %s18, 1
    %s24 = ssub.s32 %s18, 2
    %s25 = sadd.s32 %s18, 1
    %s27 = sadd.s32 %s26, 1
    %p30 = scmp.eq.s32.totalorder %s18, 3
    %p31 = scmp.ne.s32.totalorder %s26, %s28
    %p32 = scmp.eq.s32.totalorder %s18, 0
    %p33 = por %p31, %p32
    %p34 = scmp.ne.s32.totalorder %s26, %s28
    %p35 = scmp.eq.s32.totalorder %s23, 3
    %p36 = por %p34, %p35
    %p37 = scmp.ne.s32.totalorder %s28, %s29
    %p38 = scmp.eq.s32.totalorder %s23, 0
    %p39 = por %p37, %p38
    %p40 = scmp.ne.s32.totalorder %s28, %s29
    %p41 = scmp.eq.s32.totalorder %s24, 3
    %p42 = por %p40, %p41
    %p44 = scmp.ne.s32.totalorder %s29, %s43
    %p45 = scmp.eq.s32.totalorder %s24, 0
    %p46 = por %p44, %p45
    %s48 = sadd.s32 %s47, 1
    %p51 = scmp.eq.s32.totalorder %s18, 3
    %p52 = scmp.ne.s32.totalorder %s47, %s49
    %p53 = scmp.eq.s32.totalorder %s18, 0
    %p54 = por %p52, %p53
    %p55 = scmp.ne.s32.totalorder %s47, %s49
    %p56 = scmp.eq.s32.totalorder %s23, 3
    %p57 = por %p55, %p56
    %p58 = scmp.ne.s32.totalorder %s49, %s50
    %p59 = scmp.eq.s32.totalorder %s23, 0
    %p60 = por %p58, %p59
    %p61 = scmp.ne.s32.totalorder %s49, %s50
    %p62 = scmp.eq.s32.totalorder %s24, 3
    %p63 = por %p61, %p62
    %p65 = scmp.ne.s32.totalorder %s50, %s64
    %p66 = scmp.eq.s32.totalorder %s24, 0
    %p67 = por %p65, %p66
    %s69 = sadd.s32 %s68, 1
    %p72 = scmp.eq.s32.totalorder %s18, 3
    %p73 = scmp.ne.s32.totalorder %s68, %s70
    %p74 = scmp.eq.s32.totalorder %s18, 0
    %p75 = por %p73, %p74
    %p76 = scmp.ne.s32.totalorder %s68, %s70
    %p77 = scmp.eq.s32.totalorder %s23, 3
    %p78 = por %p76, %p77
    %p79 = scmp.ne.s32.totalorder %s70, %s71
    %p80 = scmp.eq.s32.totalorder %s23, 0
    %p81 = por %p79, %p80
    %p82 = scmp.ne.s32.totalorder %s70, %s71
    %p83 = scmp.eq.s32.totalorder %s24, 3
    %p84 = por %p82, %p83
    %p86 = scmp.ne.s32.totalorder %s71, %s85
    %p87 = scmp.eq.s32.totalorder %s24, 0
    %p88 = por %p86, %p87
    %s90 = sadd.s32 %s89, 1
    %p93 = scmp.eq.s32.totalorder %s18, 3
    %p94 = scmp.ne.s32.totalorder %s89, %s91
    %p95 = scmp.eq.s32.totalorder %s18, 0
    %p96 = por %p94, %p95
    %p97 = scmp.ne.s32.totalorder %s89, %s91
    %p98 = scmp.eq.s32.totalorder %s23, 3
    %p99 = por %p97, %p98
    %p100 = scmp.ne.s32.totalorder %s91, %s92
    %p101 = scmp.eq.s32.totalorder %s23, 0
    %p102 = por %p100, %p101
    %p103 = scmp.ne.s32.totalorder %s91, %s92
    %p104 = scmp.eq.s32.totalorder %s24, 3
    %p105 = por %p103, %p104
    %p107 = scmp.ne.s32.totalorder %s92, %s106
    %p108 = scmp.eq.s32.totalorder %s24, 0
    %p109 = por %p107, %p108
    %s111 = sadd.s32 %s110, 1
    %p114 = scmp.eq.s32.totalorder %s18, 3
    %p115 = scmp.ne.s32.totalorder %s110, %s112
    %p116 = scmp.eq.s32.totalorder %s18, 0
    %p117 = por %p115, %p116
    %p118 = scmp.ne.s32.totalorder %s110, %s112
    %p119 = scmp.eq.s32.totalorder %s23, 3
    %p120 = por %p118, %p119
    %p121 = scmp.ne.s32.totalorder %s112, %s113
    %p122 = scmp.eq.s32.totalorder %s23, 0
    %p123 = por %p121, %p122
    %p124 = scmp.ne.s32.totalorder %s112, %s113
    %p125 = scmp.eq.s32.totalorder %s24, 3
    %p126 = por %p124, %p125
    %p128 = scmp.ne.s32.totalorder %s113, %s127
    %p129 = scmp.eq.s32.totalorder %s24, 0
    %p130 = por %p128, %p129
    %s132 = sadd.s32 %s131, 1
    %p135 = scmp.eq.s32.totalorder %s18, 3
    %p136 = scmp.ne.s32.totalorder %s131, %s133
    %p137 = scmp.eq.s32.totalorder %s18, 0
    %p138 = por %p136, %p137
    %p139 = scmp.ne.s32.totalorder %s131, %s133
    %p140 = scmp.eq.s32.totalorder %s23, 3
    %p141 = por %p139, %p140
    %p142 = scmp.ne.s32.totalorder %s133, %s134
    %p143 = scmp.eq.s32.totalorder %s23, 0
    %p144 = por %p142, %p143
    %p145 = scmp.ne.s32.totalorder %s133, %s134
    %p146 = scmp.eq.s32.totalorder %s24, 3
    %p147 = por %p145, %p146
    %p149 = scmp.ne.s32.totalorder %s134, %s148
    %p150 = scmp.eq.s32.totalorder %s24, 0
    %p151 = por %p149, %p150
    %s153 = sadd.s32 %s152, 1
    %p156 = scmp.eq.s32.totalorder %s18, 3
    %p157 = scmp.ne.s32.totalorder %s152, %s154
    %p158 = scmp.eq.s32.totalorder %s18, 0
    %p159 = por %p157, %p158
    %p160 = scmp.ne.s32.totalorder %s152, %s154
    %p161 = scmp.eq.s32.totalorder %s23, 3
    %p162 = por %p160, %p161
    %p163 = scmp.ne.s32.totalorder %s154, %s155
    %p164 = scmp.eq.s32.totalorder %s23, 0
    %p165 = por %p163, %p164
    %p166 = scmp.ne.s32.totalorder %s154, %s155
    %p167 = scmp.eq.s32.totalorder %s24, 3
    %p168 = por %p166, %p167
    %p170 = scmp.ne.s32.totalorder %s155, %s169
    %p171 = scmp.eq.s32.totalorder %s24, 0
    %p172 = por %p170, %p171
    %s174 = sadd.s32 %s173, 1
    %p177 = scmp.eq.s32.totalorder %s18, 3
    %p178 = scmp.ne.s32.totalorder %s173, %s175
    %p179 = scmp.eq.s32.totalorder %s18, 0
    %p180 = por %p178, %p179
    %p181 = scmp.ne.s32.totalorder %s173, %s175
    %p182 = scmp.eq.s32.totalorder %s23, 3
    %p183 = por %p181, %p182
    %p184 = scmp.ne.s32.totalorder %s175, %s176
    %p185 = scmp.eq.s32.totalorder %s23, 0
    %p186 = por %p184, %p185
    %p187 = scmp.ne.s32.totalorder %s175, %s176
    %p188 = scmp.eq.s32.totalorder %s24, 3
    %p189 = por %p187, %p188
    %p191 = scmp.ne.s32.totalorder %s176, %s190
    %p192 = scmp.eq.s32.totalorder %s24, 0
    %p193 = por %p191, %p192
    %s195 = sadd.s32 %s194, 1
    %p198 = scmp.eq.s32.totalorder %s18, 3
    %p199 = scmp.ne.s32.totalorder %s194, %s196
    %p200 = scmp.eq.s32.totalorder %s18, 0
    %p201 = por %p199, %p200
    %p202 = scmp.ne.s32.totalorder %s194, %s196
    %p203 = scmp.eq.s32.totalorder %s23, 3
    %p204 = por %p202, %p203
    %p205 = scmp.ne.s32.totalorder %s196, %s197
    %p206 = scmp.eq.s32.totalorder %s23, 0
    %p207 = por %p205, %p206
    %p208 = scmp.ne.s32.totalorder %s196, %s197
    %p209 = scmp.eq.s32.totalorder %s24, 3
    %p210 = por %p208, %p209
    %p212 = scmp.ne.s32.totalorder %s197, %s211
    %p213 = scmp.eq.s32.totalorder %s24, 0
    %p214 = por %p212, %p213
    %s216 = sadd.s32 %s215, 1
    %p219 = scmp.eq.s32.totalorder %s18, 3
    %p220 = scmp.ne.s32.totalorder %s215, %s217
    %p221 = scmp.eq.s32.totalorder %s18, 0
    %p222 = por %p220, %p221
    %p223 = scmp.ne.s32.totalorder %s215, %s217
    %p224 = scmp.eq.s32.totalorder %s23, 3
    %p225 = por %p223, %p224
    %p226 = scmp.ne.s32.totalorder %s217, %s218
    %p227 = scmp.eq.s32.totalorder %s23, 0
    %p228 = por %p226, %p227
    %p229 = scmp.ne.s32.totalorder %s217, %s218
    %p230 = scmp.eq.s32.totalorder %s24, 3
    %p231 = por %p229, %p230
    %p233 = scmp.ne.s32.totalorder %s218, %s232
    %p234 = scmp.eq.s32.totalorder %s24, 0
    %p235 = por %p233, %p234
    %s237 = sadd.s32 %s236, 1
    %p240 = scmp.eq.s32.totalorder %s18, 3
    %p241 = scmp.ne.s32.totalorder %s236, %s238
    %p242 = scmp.eq.s32.totalorder %s18, 0
    %p243 = por %p241, %p242
    %p244 = scmp.ne.s32.totalorder %s236, %s238
    %p245 = scmp.eq.s32.totalorder %s23, 3
    %p246 = por %p244, %p245
    %p247 = scmp.ne.s32.totalorder %s238, %s239
    %p248 = scmp.eq.s32.totalorder %s23, 0
    %p249 = por %p247, %p248
    %p250 = scmp.ne.s32.totalorder %s238, %s239
    %p251 = scmp.eq.s32.totalorder %s24, 3
    %p252 = por %p250, %p251
    %p254 = scmp.ne.s32.totalorder %s239, %s253
    %p255 = scmp.eq.s32.totalorder %s24, 0
    %p256 = por %p254, %p255
    %s258 = sadd.s32 %s257, 1
    %p261 = scmp.eq.s32.totalorder %s18, 3
    %p262 = scmp.ne.s32.totalorder %s257, %s259
    %p263 = scmp.eq.s32.totalorder %s18, 0
    %p264 = por %p262, %p263
    %p265 = scmp.ne.s32.totalorder %s257, %s259
    %p266 = scmp.eq.s32.totalorder %s23, 3
    %p267 = por %p265, %p266
    %p268 = scmp.ne.s32.totalorder %s259, %s260
    %p269 = scmp.eq.s32.totalorder %s23, 0
    %p270 = por %p268, %p269
    %p271 = scmp.ne.s32.totalorder %s259, %s260
    %p272 = scmp.eq.s32.totalorder %s24, 3
    %p273 = por %p271, %p272
    %p275 = scmp.ne.s32.totalorder %s260, %s274
    %p276 = scmp.eq.s32.totalorder %s24, 0
    %p277 = por %p275, %p276
    %p278 = scmp.le.s32.totalorder 1, %s18
    %p279 = scmp.lt.s32.totalorder %s18, 5
    %p280 = pnand %p278, %p279
    %p281 = pneg %p280
    // Predicated region
    $region9: #{tpu_custom_call.1} parent=5 // pred_check
      _
    $region10: #{tpu_custom_call.1} parent=5 // pred_check_branch
      %283 = sbr.rel (%p280) target = $region12
    $region11: #{tpu_custom_call.1} parent=5 // pred_region
      %s284 = ssub.s32 %s18, 1
      // Predicated region
      $region13: #{tpu_custom_call.1} parent=11 // pred_check
        %p285 = pneg %p39
      $region14: #{tpu_custom_call.1} parent=11 // pred_check_branch
        %287 = sbr.rel (%p285) target = $region16
      $region15: #{tpu_custom_call.1} parent=11 // pred_region
        _
      $region16: #{tpu_custom_call.1} parent=11 // pred_fallthru
        _
      // Predicated region
      $region17: #{tpu_custom_call.1} parent=11 // pred_check
        %p288 = pneg %p60
      $region18: #{tpu_custom_call.1} parent=11 // pred_check_branch
        %290 = sbr.rel (%p288) target = $region20
      $region19: #{tpu_custom_call.1} parent=11 // pred_region
        _
      $region20: #{tpu_custom_call.1} parent=11 // pred_fallthru
        _
      // Predicated region
      $region21: #{tpu_custom_call.1} parent=11 // pred_check
        %p291 = pneg %p81
      $region22: #{tpu_custom_call.1} parent=11 // pred_check_branch
        %293 = sbr.rel (%p291) target = $region24
      $region23: #{tpu_custom_call.1} parent=11 // pred_region
        _
      $region24: #{tpu_custom_call.1} parent=11 // pred_fallthru
        _
      // Predicated region
      $region25: #{tpu_custom_call.1} parent=11 // pred_check
        %p294 = pneg %p102
      $region26: #{tpu_custom_call.1} parent=11 // pred_check_branch
        %296 = sbr.rel (%p294) target = $region28
      $region27: #{tpu_custom_call.1} parent=11 // pred_region
        _
      $region28: #{tpu_custom_call.1} parent=11 // pred_fallthru
        _
      // Predicated region
      $region29: #{tpu_custom_call.1} parent=11 // pred_check
        %p297 = pneg %p123
      $region30: #{tpu_custom_call.1} parent=11 // pred_check_branch
        %299 = sbr.rel (%p297) target = $region32
      $region31: #{tpu_custom_call.1} parent=11 // pred_region
        _
      $region32: #{tpu_custom_call.1} parent=11 // pred_fallthru
        _
      // Predicated region
      $region33: #{tpu_custom_call.1} parent=11 // pred_check
        %p300 = pneg %p144
      $region34: #{tpu_custom_call.1} parent=11 // pred_check_branch
        %302 = sbr.rel (%p300) target = $region36
      $region35: #{tpu_custom_call.1} parent=11 // pred_region
        _
      $region36: #{tpu_custom_call.1} parent=11 // pred_fallthru
        _
      // Predicated region
      $region37: #{tpu_custom_call.1} parent=11 // pred_check
        %p303 = pneg %p165
      $region38: #{tpu_custom_call.1} parent=11 // pred_check_branch
        %305 = sbr.rel (%p303) target = $region40
      $region39: #{tpu_custom_call.1} parent=11 // pred_region
        _
      $region40: #{tpu_custom_call.1} parent=11 // pred_fallthru
        _
      // Predicated region
      $region41: #{tpu_custom_call.1} parent=11 // pred_check
        %p306 = pneg %p186
      $region42: #{tpu_custom_call.1} parent=11 // pred_check_branch
        %308 = sbr.rel (%p306) target = $region44
      $region43: #{tpu_custom_call.1} parent=11 // pred_region
        _
      $region44: #{tpu_custom_call.1} parent=11 // pred_fallthru
        _
      // Predicated region
      $region45: #{tpu_custom_call.1} parent=11 // pred_check
        %p309 = pneg %p207
      $region46: #{tpu_custom_call.1} parent=11 // pred_check_branch
        %311 = sbr.rel (%p309) target = $region48
      $region47: #{tpu_custom_call.1} parent=11 // pred_region
        _
      $region48: #{tpu_custom_call.1} parent=11 // pred_fallthru
        _
      // Predicated region
      $region49: #{tpu_custom_call.1} parent=11 // pred_check
        %p312 = pneg %p228
      $region50: #{tpu_custom_call.1} parent=11 // pred_check_branch
        %314 = sbr.rel (%p312) target = $region52
      $region51: #{tpu_custom_call.1} parent=11 // pred_region
        _
      $region52: #{tpu_custom_call.1} parent=11 // pred_fallthru
        _
    $region12: #{tpu_custom_call.1} parent=5 // pred_fallthru
      _
    %p315 = scmp.lt.s32.totalorder %s18, 4
    // Predicated region
    $region53: #{tpu_custom_call.1} parent=5 // pred_check
      %p316 = pneg %p315
    $region54: #{tpu_custom_call.1} parent=5 // pred_check_branch
      %318 = sbr.rel (%p316) target = $region56
    $region55: #{tpu_custom_call.1} parent=5 // pred_region
      _
    $region56: #{tpu_custom_call.1} parent=5 // pred_fallthru
      _
    %p319 = scmp.le.s32.totalorder 1, %s18
    %p320 = scmp.lt.s32.totalorder %s18, 5
    %p321 = pnand %p319, %p320
    %p322 = pneg %p321
    // Predicated region
    $region57: #{tpu_custom_call.1} parent=5 // pred_check
      _
    $region58: #{tpu_custom_call.1} parent=5 // pred_check_branch
      %324 = sbr.rel (%p321) target = $region60
    $region59: #{tpu_custom_call.1} parent=5 // pred_region
      %s325 = ssub.s32 %s18, 1
      %p326 = pneg %p39
      %p327 = pneg %p36
      %p328 = pneg %p60
      %p329 = pneg %p57
      %p330 = pneg %p81
      %p331 = pneg %p78
      %p332 = pneg %p102
      %p333 = pneg %p99
      %p334 = pneg %p123
      %p335 = pneg %p120
      %p336 = pneg %p144
      %p337 = pneg %p141
      %p338 = pneg %p165
      %p339 = pneg %p162
      %p340 = pneg %p186
      %p341 = pneg %p183
      %p342 = pneg %p207
      %p343 = pneg %p204
      %p344 = pneg %p228
      %p345 = pneg %p225
      %p346 = pneg %p249
      %p347 = pneg %p246
      %p348 = pneg %p270
      %p349 = pneg %p267
      %p350 = scmp.eq.s32.totalorder %s23, 0
      // Predicated region
      $region61: #{tpu_custom_call.1} parent=59 // pred_check
        %p351 = pneg %p350
      $region62: #{tpu_custom_call.1} parent=59 // pred_check_branch
        %353 = sbr.rel (%p351) target = $region64
      $region63: #{tpu_custom_call.1} parent=59 // pred_region
        %v354 = vld [vmem:[%s0] sm:$0xff]
        %v355 = vld [vmem:[%s5] sm:$0xf]
        %v356 = vld [vmem:[%s6] sm:$0x1]
        %v358 = vlaneseq
        %v359 = vshrl.u32 %v358, 7
        %v360 = vsub.s32 0, %v359
        %v361 = vrot.slane %v356, %v360
        %vm363 = vcmask 31744
        %v365 = vsel %vm363, %v354, 0
        %vm367 = vcmask 1043456
        %v369 = vsel %vm367, %v355, 0
        %371 = vmatprep.subr.mxu0 0.0
        %372 = vmatpush1.msra.mxu0 %v369
        %373 = vmatprep.subr.mxu0 0.0
        %374 = vmatpush1.msra.mxu0 0.0
        %375 = vmatprep.subr.mxu0 0.0
        %376 = vmatpush1.msra.mxu0 0.0
        %377 = vmatprep.subr.mxu0 0.0
        %378 = vmatpush1.msra.mxu0 0.0
        %379 = vmatprep.subr.mxu0 0.0
        %380 = vmatpush1.msra.mxu0 0.0
        %381 = vmatprep.subr.mxu0 0.0
        %382 = vmatpush1.msra.mxu0 0.0
        %383 = vmatprep.subr.mxu0 0.0
        %384 = vmatpush1.msra.mxu0 0.0
        %385 = vmatprep.subr.mxu0 0.0
        %386 = vmatpush1.msra.mxu0 0.0
        %387 = vmatprep.subr.mxu0 0.0
        %388 = vmatpush1.msra.mxu0 0.0
        %389 = vmatprep.subr.mxu0 0.0
        %390 = vmatpush1.msra.mxu0 0.0
        %391 = vmatprep.subr.mxu0 0.0
        %392 = vmatpush1.msra.mxu0 0.0
        %393 = vmatprep.subr.mxu0 0.0
        %394 = vmatpush1.msra.mxu0 0.0
        %395 = vmatprep.subr.mxu0 0.0
        %396 = vmatpush1.msra.mxu0 0.0
        %397 = vmatprep.subr.mxu0 0.0
        %398 = vmatpush1.msra.mxu0 0.0
        %399 = vmatprep.subr.mxu0 0.0
        %400 = vmatpush1.msra.mxu0 0.0
        %401 = vmatprep.subr.mxu0 0.0
        %402 = vmatpush1.msra.mxu0 0.0
        %403 = vmatprep.subr.mxu0 0.0
        %404 = vmatpush1.msra.mxu0 0.0
        %405 = vmatprep.subr.mxu0 0.0
        %406 = vmatpush1.msra.mxu0 0.0
        %407 = vmatprep.subr.mxu0 0.0
        %408 = vmatpush1.msra.mxu0 0.0
        %409 = vmatprep.subr.mxu0 0.0
        %410 = vmatpush1.msra.mxu0 0.0
        %411 = vmatprep.subr.mxu0 0.0
        %412 = vmatpush1.msra.mxu0 0.0
        %413 = vmatprep.subr.mxu0 0.0
        %414 = vmatpush1.msra.mxu0 0.0
        %415 = vmatprep.subr.mxu0 0.0
        %416 = vmatpush1.msra.mxu0 0.0
        %417 = vmatprep.subr.mxu0 0.0
        %418 = vmatpush1.msra.mxu0 0.0
        %419 = vmatprep.subr.mxu0 0.0
        %420 = vmatpush1.msra.mxu0 0.0
        %421 = vmatprep.subr.mxu0 0.0
        %422 = vmatpush1.msra.mxu0 0.0
        %423 = vmatprep.subr.mxu0 0.0
        %424 = vmatpush1.msra.mxu0 0.0
        %425 = vmatprep.subr.mxu0 0.0
        %426 = vmatpush1.msra.mxu0 0.0
        %427 = vmatprep.subr.mxu0 0.0
        %428 = vmatpush1.msra.mxu0 0.0
        %429 = vmatprep.subr.mxu0 0.0
        %430 = vmatpush1.msra.mxu0 0.0
        %431 = vmatprep.subr.mxu0 0.0
        %432 = vmatpush1.msra.mxu0 0.0
        %433 = vmatprep.subr.mxu0 0.0
        %434 = vmatpush1.msra.mxu0 0.0
        %435 = vmatprep.mubr.f32.mxu0 0.0
        %436 = vmatmul.mubr.f32.gmra.mrb[0].mxu0 %v365
        %v437 = vpop.f32.mrb[0].mxu0
        %v438 = vadd.f32 %v361, %v437
        %v439 = vpop.f32.mrb[0].mxu0
        %440 = vdwg.mxu0
        %vm441 = vcmask 261120
        %442 = vst.msk [vmem:[#allocation2] sm:$0xff] %vm441, %v438
        %v443 = vld [vmem:[%s1] sm:$0xff]
        %vm444 = vcmask 23552
        %445 = vst.msk [vmem:[#allocation3] sm:$0xff] %vm444, %v443
      $region64: #{tpu_custom_call.1} parent=59 // pred_fallthru
        _
      %s446 = smul.u32 %s23, 288
      %s447 = scalar_lea.vmem %s9, %s446
      %v448 = vld [vmem:[%s447] sm:$0xff]
      %v449 = vld [vmem:[%s447 + $0x8] sm:$0xff]
      %v450 = vld [vmem:[%s447 + $0x10] sm:$0xff]
      %v451 = vld [vmem:[%s447 + $0x18] sm:$0xff]
      %v452 = vld [vmem:[%s447 + $0x20] sm:$0xff]
      %v453 = vld [vmem:[%s447 + $0x28] sm:$0xff]
      %v454 = vld [vmem:[%s447 + $0x30] sm:$0xff]
      %v455 = vld [vmem:[%s447 + $0x38] sm:$0xff]
      %v456 = vld [vmem:[%s447 + $0x40] sm:$0xff]
      %v457 = vld [vmem:[%s447 + $0x48] sm:$0xff]
      %v458 = vld [vmem:[%s447 + $0x50] sm:$0xff]
      %v459 = vld [vmem:[%s447 + $0x58] sm:$0xff]
      %v460 = vld [vmem:[%s447 + $0x60] sm:$0xff]
      %v461 = vld [vmem:[%s447 + $0x68] sm:$0xff]
      %v462 = vld [vmem:[%s447 + $0x70] sm:$0xff]
      %v463 = vld [vmem:[%s447 + $0x78] sm:$0xff]
      %v464 = vld [vmem:[%s447 + $0x80] sm:$0xff]
      %v465 = vld [vmem:[%s447 + $0x88] sm:$0xff]
      %v466 = vld [vmem:[%s447 + $0x90] sm:$0xff]
      %v467 = vld [vmem:[%s447 + $0x98] sm:$0xff]
      %v468 = vld [vmem:[%s447 + $0xa0] sm:$0xff]
      %v469 = vld [vmem:[%s447 + $0xa8] sm:$0xff]
      %v470 = vld [vmem:[%s447 + $0xb0] sm:$0xff]
      %v471 = vld [vmem:[%s447 + $0xb8] sm:$0xff]
      %v472 = vld [vmem:[%s447 + $0xc0] sm:$0xff]
      %v473 = vld [vmem:[%s447 + $0xc8] sm:$0xff]
      %v474 = vld [vmem:[%s447 + $0xd0] sm:$0xff]
      %v475 = vld [vmem:[%s447 + $0xd8] sm:$0xff]
      %v476 = vld [vmem:[%s447 + $0xe0] sm:$0xff]
      %v477 = vld [vmem:[%s447 + $0xe8] sm:$0xff]
      %v478 = vld [vmem:[%s447 + $0xf0] sm:$0xff]
      %v479 = vld [vmem:[%s447 + $0xf8] sm:$0xff]
      %v480 = vld [vmem:[%s447 + $0x100] sm:$0xff]
      %v481 = vld [vmem:[%s447 + $0x108] sm:$0xff]
      %v482 = vld [vmem:[%s447 + $0x110] sm:$0xff]
      %v483 = vld [vmem:[%s447 + $0x118] sm:$0xff]
      %v484 = vld [vmem:[#allocation2] sm:$0xff]
      %v485 = vld [vmem:[#allocation3] sm:$0xff]
      %487 = vrot.lane.b32.xlu0 %v485, 32
      %v488 = vpop.permute.xlu0 %487
      %vm490 = vcmask 261120
      %v491 = vsel %vm490, %v484, %v488
      %v492 = vld [vmem:[%s2] sm:$0xff]
      %v493 = vld [vmem:[%s2 + $0x8] sm:$0xff]
      %v494 = vld [vmem:[%s2 + $0x10] sm:$0xff]
      %v495 = vld [vmem:[%s2 + $0x18] sm:$0xff]
      %v496 = vld [vmem:[%s2 + $0x20] sm:$0xff]
      %v497 = vld [vmem:[%s2 + $0x28] sm:$0xff]
      %v498 = vld [vmem:[%s2 + $0x30] sm:$0xff]
      %v499 = vld [vmem:[%s2 + $0x38] sm:$0xff]
      %v500 = vld [vmem:[%s2 + $0x40] sm:$0xff]
      %v501 = vld [vmem:[%s2 + $0x48] sm:$0xff]
      %v502 = vld [vmem:[%s2 + $0x50] sm:$0xff]
      %v503 = vld [vmem:[%s2 + $0x58] sm:$0xff]
      %v504 = vld [vmem:[%s2 + $0x60] sm:$0xff]
      %v505 = vld [vmem:[%s2 + $0x68] sm:$0xff]
      %vm506 = vcmask 64512
      %v508 = vsel %vm506, %v492, 0
      %v511 = vsel %vm506, %v493, 0
      %v514 = vsel %vm506, %v494, 0
      %v517 = vsel %vm506, %v495, 0
      %v520 = vsel %vm506, %v496, 0
      %v523 = vsel %vm506, %v497, 0
      %v526 = vsel %vm506, %v498, 0
      %v529 = vsel %vm506, %v499, 0
      %v532 = vsel %vm506, %v500, 0
      %v535 = vsel %vm506, %v501, 0
      %v538 = vsel %vm506, %v502, 0
      %v541 = vsel %vm506, %v503, 0
      %v544 = vsel %vm506, %v504, 0
      %v547 = vsel %vm506, %v505, 0
      %549 = vmatprep.subr.mxu0 0.0
      %550 = vmatpush1.msra.mxu0 %v491
      %551 = vmatprep.subr.mxu0 0.0
      %552 = vmatpush1.msra.mxu0 0.0
      %553 = vmatprep.subr.mxu0 0.0
      %554 = vmatpush1.msra.mxu0 0.0
      %555 = vmatprep.subr.mxu0 0.0
      %556 = vmatpush1.msra.mxu0 0.0
      %557 = vmatprep.subr.mxu0 0.0
      %558 = vmatpush1.msra.mxu0 0.0
      %559 = vmatprep.subr.mxu0 0.0
      %560 = vmatpush1.msra.mxu0 0.0
      %561 = vmatprep.subr.mxu0 0.0
      %562 = vmatpush1.msra.mxu0 0.0
      %563 = vmatprep.subr.mxu0 0.0
      %564 = vmatpush1.msra.mxu0 0.0
      %565 = vmatprep.subr.mxu0 0.0
      %566 = vmatpush1.msra.mxu0 0.0
      %567 = vmatprep.subr.mxu0 0.0
      %568 = vmatpush1.msra.mxu0 0.0
      %569 = vmatprep.subr.mxu0 0.0
      %570 = vmatpush1.msra.mxu0 0.0
      %571 = vmatprep.subr.mxu0 0.0
      %572 = vmatpush1.msra.mxu0 0.0
      %573 = vmatprep.subr.mxu0 0.0
      %574 = vmatpush1.msra.mxu0 0.0
      %575 = vmatprep.subr.mxu0 0.0
      %576 = vmatpush1.msra.mxu0 0.0
      %577 = vmatprep.subr.mxu0 0.0
      %578 = vmatpush1.msra.mxu0 0.0
      %579 = vmatprep.subr.mxu0 0.0
      %580 = vmatpush1.msra.mxu0 0.0
      %581 = vmatprep.subr.mxu0 0.0
      %582 = vmatpush1.msra.mxu0 0.0
      %583 = vmatprep.subr.mxu0 0.0
      %584 = vmatpush1.msra.mxu0 0.0
      %585 = vmatprep.subr.mxu0 0.0
      %586 = vmatpush1.msra.mxu0 0.0
      %587 = vmatprep.subr.mxu0 0.0
      %588 = vmatpush1.msra.mxu0 0.0
      %589 = vmatprep.subr.mxu0 0.0
      %590 = vmatpush1.msra.mxu0 0.0
      %591 = vmatprep.subr.mxu0 0.0
      %592 = vmatpush1.msra.mxu0 0.0
      %593 = vmatprep.subr.mxu0 0.0
      %594 = vmatpush1.msra.mxu0 0.0
      %595 = vmatprep.subr.mxu0 0.0
      %596 = vmatpush1.msra.mxu0 0.0
      %597 = vmatprep.subr.mxu0 0.0
      %598 = vmatpush1.msra.mxu0 0.0
      %599 = vmatprep.subr.mxu0 0.0
      %600 = vmatpush1.msra.mxu0 0.0
      %601 = vmatprep.subr.mxu0 0.0
      %602 = vmatpush1.msra.mxu0 0.0
      %603 = vmatprep.subr.mxu0 0.0
      %604 = vmatpush1.msra.mxu0 0.0
      %605 = vmatprep.subr.mxu0 0.0
      %606 = vmatpush1.msra.mxu0 0.0
      %607 = vmatprep.subr.mxu0 0.0
      %608 = vmatpush1.msra.mxu0 0.0
      %609 = vmatprep.subr.mxu0 0.0
      %610 = vmatpush1.msra.mxu0 0.0
      %611 = vmatprep.subr.mxu0 0.0
      %612 = vmatpush1.msra.mxu0 0.0
      %613 = vmatprep.mubr.f32.mxu0 0.0
      %614 = vmatmul.mubr.f32.gmra.mrb[0].mxu0 %v508
      %v615 = vpop.f32.mrb[0].mxu0
      %v616 = vadd.f32 0.0, %v615
      %v617 = vpop.f32.mrb[0].mxu0
      %618 = vmatprep.mubr.f32.mxu0 0.0
      %619 = vmatmul.mubr.f32.gmra.mrb[0].mxu0 %v511
      %v620 = vpop.f32.mrb[0].mxu0
      %v621 = vadd.f32 0.0, %v620
      %v622 = vpop.f32.mrb[0].mxu0
      %623 = vmatprep.mubr.f32.mxu0 0.0
      %624 = vmatmul.mubr.f32.gmra.mrb[0].mxu0 %v514
      %v625 = vpop.f32.mrb[0].mxu0
      %v626 = vadd.f32 0.0, %v625
      %v627 = vpop.f32.mrb[0].mxu0
      %628 = vmatprep.mubr.f32.mxu0 0.0
      %629 = vmatmul.mubr.f32.gmra.mrb[0].mxu0 %v517
      %v630 = vpop.f32.mrb[0].mxu0
      %v631 = vadd.f32 0.0, %v630
      %v632 = vpop.f32.mrb[0].mxu0
      %633 = vmatprep.mubr.f32.mxu0 0.0
      %634 = vmatmul.mubr.f32.gmra.mrb[0].mxu0 %v520
      %v635 = vpop.f32.mrb[0].mxu0
      %v636 = vadd.f32 0.0, %v635
      %v637 = vpop.f32.mrb[0].mxu0
      %638 = vmatprep.mubr.f32.mxu0 0.0
      %639 = vmatmul.mubr.f32.gmra.mrb[0].mxu0 %v523
      %v640 = vpop.f32.mrb[0].mxu0
      %v641 = vadd.f32 0.0, %v640
      %v642 = vpop.f32.mrb[0].mxu0
      %643 = vmatprep.mubr.f32.mxu0 0.0
      %644 = vmatmul.mubr.f32.gmra.mrb[0].mxu0 %v526
      %v645 = vpop.f32.mrb[0].mxu0
      %v646 = vadd.f32 0.0, %v645
      %v647 = vpop.f32.mrb[0].mxu0
      %648 = vmatprep.mubr.f32.mxu0 0.0
      %649 = vmatmul.mubr.f32.gmra.mrb[0].mxu0 %v529
      %v650 = vpop.f32.mrb[0].mxu0
      %v651 = vadd.f32 0.0, %v650
      %v652 = vpop.f32.mrb[0].mxu0
      %653 = vmatprep.mubr.f32.mxu0 0.0
      %654 = vmatmul.mubr.f32.gmra.mrb[0].mxu0 %v532
      %v655 = vpop.f32.mrb[0].mxu0
      %v656 = vadd.f32 0.0, %v655
      %v657 = vpop.f32.mrb[0].mxu0
      %658 = vmatprep.mubr.f32.mxu0 0.0
      %659 = vmatmul.mubr.f32.gmra.mrb[0].mxu0 %v535
      %v660 = vpop.f32.mrb[0].mxu0
      %v661 = vadd.f32 0.0, %v660
      %v662 = vpop.f32.mrb[0].mxu0
      %663 = vmatprep.mubr.f32.mxu0 0.0
      %664 = vmatmul.mubr.f32.gmra.mrb[0].mxu0 %v538
      %v665 = vpop.f32.mrb[0].mxu0
      %v666 = vadd.f32 0.0, %v665
      %v667 = vpop.f32.mrb[0].mxu0
      %668 = vmatprep.mubr.f32.mxu0 0.0
      %669 = vmatmul.mubr.f32.gmra.mrb[0].mxu0 %v541
      %v670 = vpop.f32.mrb[0].mxu0
      %v671 = vadd.f32 0.0, %v670
      %v672 = vpop.f32.mrb[0].mxu0
      %673 = vmatprep.mubr.f32.mxu0 0.0
      %674 = vmatmul.mubr.f32.gmra.mrb[0].mxu0 %v544
      %v675 = vpop.f32.mrb[0].mxu0
      %v676 = vadd.f32 0.0, %v675
      %v677 = vpop.f32.mrb[0].mxu0
      %678 = vmatprep.mubr.f32.mxu0 0.0
      %679 = vmatmul.mubr.f32.gmra.mrb[0].mxu0 %v547
      %v680 = vpop.f32.mrb[0].mxu0
      %v681 = vadd.f32 0.0, %v680
      %v682 = vpop.f32.mrb[0].mxu0
      %683 = vdwg.mxu0
      %v684 = vsub.f32 %v616, %v651
      %v685 = vsub.f32 %v621, %v656
      %v686 = vsub.f32 %v626, %v661
      %v687 = vsub.f32 %v631, %v666
      %v688 = vsub.f32 %v636, %v671
      %v689 = vsub.f32 %v641, %v676
      %v690 = vsub.f32 %v646, %v681
      %v691 = vmul.f32 %v684, %v684
      %v692 = vmul.f32 %v685, %v685
      %v693 = vmul.f32 %v686, %v686
      %v694 = vmul.f32 %v687, %v687
      %v695 = vmul.f32 %v688, %v688
      %v696 = vmul.f32 %v689, %v689
      %v697 = vmul.f32 %v690, %v690
      %705 = vrot.lane.b32.xlu0 %v691, 96
      %v706 = vpop.permute.xlu0 %705
      %707 = vrot.lane.b32.xlu0 %v692, 96
      %v708 = vpop.permute.xlu0 %707
      %709 = vrot.lane.b32.xlu0 %v693, 96
      %v710 = vpop.permute.xlu0 %709
      %711 = vrot.lane.b32.xlu0 %v694, 96
      %v712 = vpop.permute.xlu0 %711
      %713 = vrot.lane.b32.xlu0 %v695, 96
      %v714 = vpop.permute.xlu0 %713
      %715 = vrot.lane.b32.xlu0 %v696, 96
      %v716 = vpop.permute.xlu0 %715
      %717 = vrot.lane.b32.xlu0 %v697, 96
      %v718 = vpop.permute.xlu0 %717
      %vm726 = vcmask 23552
      %v727 = vsel %vm726, %v706, 0.0
      %728 = vadd.xlane.f32.xlu0 %v727
      %v729 = vpop.xlane.xlu0 %728
      %v730 = vsel %vm726, %v708, 0.0
      %731 = vadd.xlane.f32.xlu0 %v730
      %v732 = vpop.xlane.xlu0 %731
      %v733 = vsel %vm726, %v710, 0.0
      %734 = vadd.xlane.f32.xlu0 %v733
      %v735 = vpop.xlane.xlu0 %734
      %v736 = vsel %vm726, %v712, 0.0
      %737 = vadd.xlane.f32.xlu0 %v736
      %v738 = vpop.xlane.xlu0 %737
      %v739 = vsel %vm726, %v714, 0.0
      %740 = vadd.xlane.f32.xlu0 %v739
      %v741 = vpop.xlane.xlu0 %740
      %v742 = vsel %vm726, %v716, 0.0
      %743 = vadd.xlane.f32.xlu0 %v742
      %v744 = vpop.xlane.xlu0 %743
      %v745 = vsel %vm726, %v718, 0.0
      %746 = vadd.xlane.f32.xlu0 %v745
      %v747 = vpop.xlane.xlu0 %746
      %v748 = vadd.f32 %v729, 1e-08
      %v749 = vadd.f32 %v732, 1e-08
      %v750 = vadd.f32 %v735, 1e-08
      %v751 = vadd.f32 %v738, 1e-08
      %v752 = vadd.f32 %v741, 1e-08
      %v753 = vadd.f32 %v744, 1e-08
      %v754 = vadd.f32 %v747, 1e-08
      %v755 = vrsqrt.pop %v748
      %v756 = vmul.f32 %v748, %v755
      %vm757 = vcmp.eq.f32.partialorder %v748, inf
      %v758 = vsel %vm757, %v748, %v756
      %vm759 = vcmp.eq.f32.partialorder %v748, 0.0
      %v760 = vand.u32 %v748, 2147483648
      %v761 = vsel %vm759, %v760, %v758
      %v762 = vrsqrt.pop %v749
      %v763 = vmul.f32 %v749, %v762
      %vm764 = vcmp.eq.f32.partialorder %v749, inf
      %v765 = vsel %vm764, %v749, %v763
      %vm766 = vcmp.eq.f32.partialorder %v749, 0.0
      %v767 = vand.u32 %v749, 2147483648
      %v768 = vsel %vm766, %v767, %v765
      %v769 = vrsqrt.pop %v750
      %v770 = vmul.f32 %v750, %v769
      %vm771 = vcmp.eq.f32.partialorder %v750, inf
      %v772 = vsel %vm771, %v750, %v770
      %vm773 = vcmp.eq.f32.partialorder %v750, 0.0
      %v774 = vand.u32 %v750, 2147483648
      %v775 = vsel %vm773, %v774, %v772
      %v776 = vrsqrt.pop %v751
      %v777 = vmul.f32 %v751, %v776
      %vm778 = vcmp.eq.f32.partialorder %v751, inf
      %v779 = vsel %vm778, %v751, %v777
      %vm780 = vcmp.eq.f32.partialorder %v751, 0.0
      %v781 = vand.u32 %v751, 2147483648
      %v782 = vsel %vm780, %v781, %v779
      %v783 = vrsqrt.pop %v752
      %v784 = vmul.f32 %v752, %v783
      %vm785 = vcmp.eq.f32.partialorder %v752, inf
      %v786 = vsel %vm785, %v752, %v784
      %vm787 = vcmp.eq.f32.partialorder %v752, 0.0
      %v788 = vand.u32 %v752, 2147483648
      %v789 = vsel %vm787, %v788, %v786
      %v790 = vrsqrt.pop %v753
      %v791 = vmul.f32 %v753, %v790
      %vm792 = vcmp.eq.f32.partialorder %v753, inf
      %v793 = vsel %vm792, %v753, %v791
      %vm794 = vcmp.eq.f32.partialorder %v753, 0.0
      %v795 = vand.u32 %v753, 2147483648
      %v796 = vsel %vm794, %v795, %v793
      %v797 = vrsqrt.pop %v754
      %v798 = vmul.f32 %v754, %v797
      %vm799 = vcmp.eq.f32.partialorder %v754, inf
      %v800 = vsel %vm799, %v754, %v798
      %vm801 = vcmp.eq.f32.partialorder %v754, 0.0
      %v802 = vand.u32 %v754, 2147483648
      %v803 = vsel %vm801, %v802, %v800
      %v804 = vadd.f32 %v761, 1.0
      %v805 = vadd.f32 %v768, 1.0
      %v806 = vadd.f32 %v775, 1.0
      %v807 = vadd.f32 %v782, 1.0
      %v808 = vadd.f32 %v789, 1.0
      %v809 = vadd.f32 %v796, 1.0
      %v810 = vadd.f32 %v803, 1.0
      %v811 = vrcp.pop %v804
      %v812 = vmul.f32 %v684, %v811
      %v813 = vrcp.pop %v805
      %v814 = vmul.f32 %v685, %v813
      %v815 = vrcp.pop %v806
      %v816 = vmul.f32 %v686, %v815
      %v817 = vrcp.pop %v807
      %v818 = vmul.f32 %v687, %v817
      %v819 = vrcp.pop %v808
      %v820 = vmul.f32 %v688, %v819
      %v821 = vrcp.pop %v809
      %v822 = vmul.f32 %v689, %v821
      %v823 = vrcp.pop %v810
      %v824 = vmul.f32 %v690, %v823
      %v826 = vsel %vm490, %v651, 0
      %v829 = vsel %vm490, %v656, 0
      %v832 = vsel %vm490, %v661, 0
      %v835 = vsel %vm490, %v666, 0
      %v838 = vsel %vm490, %v671, 0
      %v841 = vsel %vm490, %v676, 0
      %v844 = vsel %vm490, %v681, 0
      %846 = vmatprep.subr.mxu0 0.0
      %847 = vmatpush1.msra.mxu0 %v452
      %848 = vmatprep.subr.mxu0 0.0
      %849 = vmatpush1.msra.mxu0 %v453
      %850 = vmatprep.subr.mxu0 0.0
      %851 = vmatpush1.msra.mxu0 %v454
      %852 = vmatprep.subr.mxu0 0.0
      %853 = vmatpush1.msra.mxu0 %v455
      %854 = vmatprep.subr.mxu0 0.0
      %855 = vmatpush1.msra.mxu0 0.0
      %856 = vmatprep.subr.mxu0 0.0
      %857 = vmatpush1.msra.mxu0 0.0
      %858 = vmatprep.subr.mxu0 0.0
      %859 = vmatpush1.msra.mxu0 0.0
      %860 = vmatprep.subr.mxu0 0.0
      %861 = vmatpush1.msra.mxu0 0.0
      %862 = vmatprep.subr.mxu0 0.0
      %863 = vmatpush1.msra.mxu0 0.0
      %864 = vmatprep.subr.mxu0 0.0
      %865 = vmatpush1.msra.mxu0 0.0
      %866 = vmatprep.subr.mxu0 0.0
      %867 = vmatpush1.msra.mxu0 0.0
      %868 = vmatprep.subr.mxu0 0.0
      %869 = vmatpush1.msra.mxu0 0.0
      %870 = vmatprep.subr.mxu0 0.0
      %871 = vmatpush1.msra.mxu0 0.0
      %872 = vmatprep.subr.mxu0 0.0
      %873 = vmatpush1.msra.mxu0 0.0
      %874 = vmatprep.subr.mxu0 0.0
      %875 = vmatpush1.msra.mxu0 0.0
      %876 = vmatprep.subr.mxu0 0.0
      %877 = vmatpush1.msra.mxu0 0.0
      %878 = vmatprep.subr.mxu0 0.0
      %879 = vmatpush1.msra.mxu0 0.0
      %880 = vmatprep.subr.mxu0 0.0
      %881 = vmatpush1.msra.mxu0 0.0
      %882 = vmatprep.subr.mxu0 0.0
      %883 = vmatpush1.msra.mxu0 0.0
      %884 = vmatprep.subr.mxu0 0.0
      %885 = vmatpush1.msra.mxu0 0.0
      %886 = vmatprep.subr.mxu0 0.0
      %887 = vmatpush1.msra.mxu0 0.0
      %888 = vmatprep.subr.mxu0 0.0
      %889 = vmatpush1.msra.mxu0 0.0
      %890 = vmatprep.subr.mxu0 0.0
      %891 = vmatpush1.msra.mxu0 0.0
      %892 = vmatprep.subr.mxu0 0.0
      %893 = vmatpush1.msra.mxu0 0.0
      %894 = vmatprep.subr.mxu0 0.0
      %895 = vmatpush1.msra.mxu0 0.0
      %896 = vmatprep.subr.mxu0 0.0
      %897 = vmatpush1.msra.mxu0 0.0
      %898 = vmatprep.subr.mxu0 0.0
      %899 = vmatpush1.msra.mxu0 0.0
      %900 = vmatprep.subr.mxu0 0.0
      %901 = vmatpush1.msra.mxu0 0.0
      %902 = vmatprep.subr.mxu0 0.0
      %903 = vmatpush1.msra.mxu0 0.0
      %904 = vmatprep.subr.mxu0 0.0
      %905 = vmatpush1.msra.mxu0 0.0
      %906 = vmatprep.subr.mxu0 0.0
      %907 = vmatpush1.msra.mxu0 0.0
      %908 = vmatprep.subr.mxu0 0.0
      %909 = vmatpush1.msra.mxu0 0.0
      %910 = vmatprep.mubr.f32.mxu0 0.0
      %911 = vmatmul.mubr.f32.gmra.mrb[0].mxu0 %v826
      %v912 = vpop.f32.mrb[0].mxu0
      %v913 = vadd.f32 0.0, %v912
      %v914 = vpop.f32.mrb[0].mxu0
      %915 = vmatprep.mubr.f32.mxu0 0.0
      %916 = vmatmul.mubr.f32.gmra.mrb[0].mxu0 %v829
      %v917 = vpop.f32.mrb[0].mxu0
      %v918 = vadd.f32 0.0, %v917
      %v919 = vpop.f32.mrb[0].mxu0
      %920 = vmatprep.mubr.f32.mxu0 0.0
      %921 = vmatmul.mubr.f32.gmra.mrb[0].mxu0 %v832
      %v922 = vpop.f32.mrb[0].mxu0
      %v923 = vadd.f32 0.0, %v922
      %v924 = vpop.f32.mrb[0].mxu0
      %925 = vmatprep.mubr.f32.mxu0 0.0
      %926 = vmatmul.mubr.f32.gmra.mrb[0].mxu0 %v835
      %v927 = vpop.f32.mrb[0].mxu0
      %v928 = vadd.f32 0.0, %v927
      %v929 = vpop.f32.mrb[0].mxu0
      %930 = vmatprep.mubr.f32.mxu0 0.0
      %931 = vmatmul.mubr.f32.gmra.mrb[0].mxu0 %v838
      %v932 = vpop.f32.mrb[0].mxu0
      %v933 = vadd.f32 0.0, %v932
      %v934 = vpop.f32.mrb[0].mxu0
      %935 = vmatprep.mubr.f32.mxu0 0.0
      %936 = vmatmul.mubr.f32.gmra.mrb[0].mxu0 %v841
      %v937 = vpop.f32.mrb[0].mxu0
      %v938 = vadd.f32 0.0, %v937
      %v939 = vpop.f32.mrb[0].mxu0
      %940 = vmatprep.mubr.f32.mxu0 0.0
      %941 = vmatmul.mubr.f32.gmra.mrb[0].mxu0 %v844
      %v942 = vpop.f32.mrb[0].mxu0
      %v943 = vadd.f32 0.0, %v942
      %v944 = vpop.f32.mrb[0].mxu0
      %945 = vdwg.mxu0
      %v947 = vsel %vm490, %v616, 0
      %v950 = vsel %vm490, %v621, 0
      %v953 = vsel %vm490, %v626, 0
      %v956 = vsel %vm490, %v631, 0
      %v959 = vsel %vm490, %v636, 0
      %v962 = vsel %vm490, %v641, 0
      %v965 = vsel %vm490, %v646, 0
      %967 = vmatprep.subr.mxu0 0.0
      %968 = vmatpush1.msra.mxu0 %v448
      %969 = vmatprep.subr.mxu0 0.0
      %970 = vmatpush1.msra.mxu0 %v449
      %971 = vmatprep.subr.mxu0 0.0
      %972 = vmatpush1.msra.mxu0 %v450
      %973 = vmatprep.subr.mxu0 0.0
      %974 = vmatpush1.msra.mxu0 %v451
      %975 = vmatprep.subr.mxu0 0.0
      %976 = vmatpush1.msra.mxu0 0.0
      %977 = vmatprep.subr.mxu0 0.0
      %978 = vmatpush1.msra.mxu0 0.0
      %979 = vmatprep.subr.mxu0 0.0
      %980 = vmatpush1.msra.mxu0 0.0
      %981 = vmatprep.subr.mxu0 0.0
      %982 = vmatpush1.msra.mxu0 0.0
      %983 = vmatprep.subr.mxu0 0.0
      %984 = vmatpush1.msra.mxu0 0.0
      %985 = vmatprep.subr.mxu0 0.0
      %986 = vmatpush1.msra.mxu0 0.0
      %987 = vmatprep.subr.mxu0 0.0
      %988 = vmatpush1.msra.mxu0 0.0
      %989 = vmatprep.subr.mxu0 0.0
      %990 = vmatpush1.msra.mxu0 0.0
      %991 = vmatprep.subr.mxu0 0.0
      %992 = vmatpush1.msra.mxu0 0.0
      %993 = vmatprep.subr.mxu0 0.0
      %994 = vmatpush1.msra.mxu0 0.0
      %995 = vmatprep.subr.mxu0 0.0
      %996 = vmatpush1.msra.mxu0 0.0
      %997 = vmatprep.subr.mxu0 0.0
      %998 = vmatpush1.msra.mxu0 0.0
      %999 = vmatprep.subr.mxu0 0.0
      %1000 = vmatpush1.msra.mxu0 0.0
      %1001 = vmatprep.subr.mxu0 0.0
      %1002 = vmatpush1.msra.mxu0 0.0
      %1003 = vmatprep.subr.mxu0 0.0
      %1004 = vmatpush1.msra.mxu0 0.0
      %1005 = vmatprep.subr.mxu0 0.0
      %1006 = vmatpush1.msra.mxu0 0.0
      %1007 = vmatprep.subr.mxu0 0.0
      %1008 = vmatpush1.msra.mxu0 0.0
      %1009 = vmatprep.subr.mxu0 0.0
      %1010 = vmatpush1.msra.mxu0 0.0
      %1011 = vmatprep.subr.mxu0 0.0
      %1012 = vmatpush1.msra.mxu0 0.0
      %1013 = vmatprep.subr.mxu0 0.0
      %1014 = vmatpush1.msra.mxu0 0.0
      %1015 = vmatprep.subr.mxu0 0.0
      %1016 = vmatpush1.msra.mxu0 0.0
      %1017 = vmatprep.subr.mxu0 0.0
      %1018 = vmatpush1.msra.mxu0 0.0
      %1019 = vmatprep.subr.mxu0 0.0
      %1020 = vmatpush1.msra.mxu0 0.0
      %1021 = vmatprep.subr.mxu0 0.0
      %1022 = vmatpush1.msra.mxu0 0.0
      %1023 = vmatprep.subr.mxu0 0.0
      %1024 = vmatpush1.msra.mxu0 0.0
      %1025 = vmatprep.subr.mxu0 0.0
      %1026 = vmatpush1.msra.mxu0 0.0
      %1027 = vmatprep.subr.mxu0 0.0
      %1028 = vmatpush1.msra.mxu0 0.0
      %1029 = vmatprep.subr.mxu0 0.0
      %1030 = vmatpush1.msra.mxu0 0.0
      %1031 = vmatprep.mubr.f32.mxu0 0.0
      %1032 = vmatmul.mubr.f32.gmra.mrb[0].mxu0 %v947
      %v1033 = vpop.f32.mrb[0].mxu0
      %v1034 = vadd.f32 %v913, %v1033
      %v1035 = vpop.f32.mrb[0].mxu0
      %1036 = vmatprep.mubr.f32.mxu0 0.0
      %1037 = vmatmul.mubr.f32.gmra.mrb[0].mxu0 %v950
      %v1038 = vpop.f32.mrb[0].mxu0
      %v1039 = vadd.f32 %v918, %v1038
      %v1040 = vpop.f32.mrb[0].mxu0
      %1041 = vmatprep.mubr.f32.mxu0 0.0
      %1042 = vmatmul.mubr.f32.gmra.mrb[0].mxu0 %v953
      %v1043 = vpop.f32.mrb[0].mxu0
      %v1044 = vadd.f32 %v923, %v1043
      %v1045 = vpop.f32.mrb[0].mxu0
      %1046 = vmatprep.mubr.f32.mxu0 0.0
      %1047 = vmatmul.mubr.f32.gmra.mrb[0].mxu0 %v956
      %v1048 = vpop.f32.mrb[0].mxu0
      %v1049 = vadd.f32 %v928, %v1048
      %v1050 = vpop.f32.mrb[0].mxu0
      %1051 = vmatprep.mubr.f32.mxu0 0.0
      %1052 = vmatmul.mubr.f32.gmra.mrb[0].mxu0 %v959
      %v1053 = vpop.f32.mrb[0].mxu0
      %v1054 = vadd.f32 %v933, %v1053
      %v1055 = vpop.f32.mrb[0].mxu0
      %1056 = vmatprep.mubr.f32.mxu0 0.0
      %1057 = vmatmul.mubr.f32.gmra.mrb[0].mxu0 %v962
      %v1058 = vpop.f32.mrb[0].mxu0
      %v1059 = vadd.f32 %v938, %v1058
      %v1060 = vpop.f32.mrb[0].mxu0
      %1061 = vmatprep.mubr.f32.mxu0 0.0
      %1062 = vmatmul.mubr.f32.gmra.mrb[0].mxu0 %v965
      %v1063 = vpop.f32.mrb[0].mxu0
      %v1064 = vadd.f32 %v943, %v1063
      %v1065 = vpop.f32.mrb[0].mxu0
      %1066 = vdwg.mxu0
      %v1067 = vlaneseq
      %v1068 = vshrl.u32 %v1067, 7
      %v1069 = vsub.s32 0, %v1068
      %v1070 = vrot.slane %v456, %v1069
      %v1071 = vmul.f32 %v729, %v1070
      %v1072 = vmul.f32 %v732, %v1070
      %v1073 = vmul.f32 %v735, %v1070
      %v1074 = vmul.f32 %v738, %v1070
      %v1075 = vmul.f32 %v741, %v1070
      %v1076 = vmul.f32 %v744, %v1070
      %v1077 = vmul.f32 %v747, %v1070
      %v1078 = vadd.f32 %v1034, %v1071
      %v1079 = vadd.f32 %v1039, %v1072
      %v1080 = vadd.f32 %v1044, %v1073
      %v1081 = vadd.f32 %v1049, %v1074
      %v1082 = vadd.f32 %v1054, %v1075
      %v1083 = vadd.f32 %v1059, %v1076
      %v1084 = vadd.f32 %v1064, %v1077
      %v1085 = vlaneseq
      %v1086 = vshrl.u32 %v1085, 7
      %v1087 = vsub.s32 0, %v1086
      %v1088 = vrot.slane %v458, %v1087
      %v1089 = vadd.f32 %v1078, %v1088
      %v1090 = vadd.f32 %v1079, %v1088
      %v1091 = vadd.f32 %v1080, %v1088
      %v1092 = vadd.f32 %v1081, %v1088
      %v1093 = vadd.f32 %v1082, %v1088
      %v1094 = vadd.f32 %v1083, %v1088
      %v1095 = vadd.f32 %v1084, %v1088
      %v1096 = vld [vmem:[%s4] sm:$0xff]
      %v1097 = vld [vmem:[%s4 + $0x8] sm:$0xff]
      %v1098 = vld [vmem:[%s4 + $0x10] sm:$0xff]
      %v1099 = vld [vmem:[%s4 + $0x18] sm:$0xff]
      %v1100 = vld [vmem:[%s4 + $0x20] sm:$0xff]
      %v1101 = vld [vmem:[%s4 + $0x28] sm:$0xff]
      %v1102 = vld [vmem:[%s4 + $0x30] sm:$0xff]
      %1104 = vset.pattern.permute.xlu0 0
      %1105 = vperm.xlu0 %1104, %v1096
      %v1106 = vpop.permute.xlu0 %1105
      %1109 = vset.pattern.permute.xlu0 0
      %1110 = vperm.xlu0 %1109, %v1097
      %v1111 = vpop.permute.xlu0 %1110
      %1114 = vset.pattern.permute.xlu0 0
      %1115 = vperm.xlu0 %1114, %v1098
      %v1116 = vpop.permute.xlu0 %1115
      %1119 = vset.pattern.permute.xlu0 0
      %1120 = vperm.xlu0 %1119, %v1099
      %v1121 = vpop.permute.xlu0 %1120
      %1124 = vset.pattern.permute.xlu0 0
      %1125 = vperm.xlu0 %1124, %v1100
      %v1126 = vpop.permute.xlu0 %1125
      %1129 = vset.pattern.permute.xlu0 0
      %1130 = vperm.xlu0 %1129, %v1101
      %v1131 = vpop.permute.xlu0 %1130
      %1134 = vset.pattern.permute.xlu0 0
      %1135 = vperm.xlu0 %1134, %v1102
      %v1136 = vpop.permute.xlu0 %1135
      %v1138 = vlaneseq
      %v1139 = vshrl.u32 %v1138, 7
      %v1140 = vsub.s32 0, %v1139
      %v1141 = vrot.slane %v457, %v1140
      %v1142 = vmul.f32 %v1106, %v1141
      %v1143 = vmul.f32 %v1111, %v1141
      %v1144 = vmul.f32 %v1116, %v1141
      %v1145 = vmul.f32 %v1121, %v1141
      %v1146 = vmul.f32 %v1126, %v1141
      %v1147 = vmul.f32 %v1131, %v1141
      %v1148 = vmul.f32 %v1136, %v1141
      %v1149 = vadd.f32 %v1089, %v1142
      %v1150 = vadd.f32 %v1090, %v1143
      %v1151 = vadd.f32 %v1091, %v1144
      %v1152 = vadd.f32 %v1092, %v1145
      %v1153 = vadd.f32 %v1093, %v1146
      %v1154 = vadd.f32 %v1094, %v1147
      %v1155 = vadd.f32 %v1095, %v1148
      %v1156 = vxor.u32 %v1149, 2147483648
      %v1157 = vxor.u32 %v1150, 2147483648
      %v1158 = vxor.u32 %v1151, 2147483648
      %v1159 = vxor.u32 %v1152, 2147483648
      %v1160 = vxor.u32 %v1153, 2147483648
      %v1161 = vxor.u32 %v1154, 2147483648
      %v1162 = vxor.u32 %v1155, 2147483648
      %v1163 = vmul.f32 %v1156, 1.442695
      %v1164 = vpow.pop %v1163
      %v1165 = vmul.f32 %v1157, 1.442695
      %v1166 = vpow.pop %v1165
      %v1167 = vmul.f32 %v1158, 1.442695
      %v1168 = vpow.pop %v1167
      %v1169 = vmul.f32 %v1159, 1.442695
      %v1170 = vpow.pop %v1169
      %v1171 = vmul.f32 %v1160, 1.442695
      %v1172 = vpow.pop %v1171
      %v1173 = vmul.f32 %v1161, 1.442695
      %v1174 = vpow.pop %v1173
      %v1175 = vmul.f32 %v1162, 1.442695
      %v1176 = vpow.pop %v1175
      %v1177 = vadd.f32 %v1164, 1.0
      %v1178 = vadd.f32 %v1166, 1.0
      %v1179 = vadd.f32 %v1168, 1.0
      %v1180 = vadd.f32 %v1170, 1.0
      %v1181 = vadd.f32 %v1172, 1.0
      %v1182 = vadd.f32 %v1174, 1.0
      %v1183 = vadd.f32 %v1176, 1.0
      %v1184 = vrcp.pop %v1177
      %v1185 = vmul.f32 1.0, %v1184
      %v1186 = vrcp.pop %v1178
      %v1187 = vmul.f32 1.0, %v1186
      %v1188 = vrcp.pop %v1179
      %v1189 = vmul.f32 1.0, %v1188
      %v1190 = vrcp.pop %v1180
      %v1191 = vmul.f32 1.0, %v1190
      %v1192 = vrcp.pop %v1181
      %v1193 = vmul.f32 1.0, %v1192
      %v1194 = vrcp.pop %v1182
      %v1195 = vmul.f32 1.0, %v1194
      %v1196 = vrcp.pop %v1183
      %v1197 = vmul.f32 1.0, %v1196
      %v1198 = vmul.f32 %v1149, %v1185
      %v1199 = vmul.f32 %v1150, %v1187
      %v1200 = vmul.f32 %v1151, %v1189
      %v1201 = vmul.f32 %v1152, %v1191
      %v1202 = vmul.f32 %v1153, %v1193
      %v1203 = vmul.f32 %v1154, %v1195
      %v1204 = vmul.f32 %v1155, %v1197
      %v1205 = vlaneseq
      %v1206 = vshrl.u32 %v1205, 7
      %v1207 = vsub.s32 0, %v1206
      %v1208 = vrot.slane %v463, %v1207
      %v1210 = vsel %vm490, %v1198, 0
      %v1213 = vsel %vm490, %v1199, 0
      %v1216 = vsel %vm490, %v1200, 0
      %v1219 = vsel %vm490, %v1201, 0
      %v1222 = vsel %vm490, %v1202, 0
      %v1225 = vsel %vm490, %v1203, 0
      %v1228 = vsel %vm490, %v1204, 0
      %1230 = vmatprep.subr.mxu0 0.0
      %1231 = vmatpush1.msra.mxu0 %v459
      %1232 = vmatprep.subr.mxu0 0.0
      %1233 = vmatpush1.msra.mxu0 %v460
      %1234 = vmatprep.subr.mxu0 0.0
      %1235 = vmatpush1.msra.mxu0 %v461
      %1236 = vmatprep.subr.mxu0 0.0
      %1237 = vmatpush1.msra.mxu0 %v462
      %1238 = vmatprep.subr.mxu0 0.0
      %1239 = vmatpush1.msra.mxu0 0.0
      %1240 = vmatprep.subr.mxu0 0.0
      %1241 = vmatpush1.msra.mxu0 0.0
      %1242 = vmatprep.subr.mxu0 0.0
      %1243 = vmatpush1.msra.mxu0 0.0
      %1244 = vmatprep.subr.mxu0 0.0
      %1245 = vmatpush1.msra.mxu0 0.0
      %1246 = vmatprep.subr.mxu0 0.0
      %1247 = vmatpush1.msra.mxu0 0.0
      %1248 = vmatprep.subr.mxu0 0.0
      %1249 = vmatpush1.msra.mxu0 0.0
      %1250 = vmatprep.subr.mxu0 0.0
      %1251 = vmatpush1.msra.mxu0 0.0
      %1252 = vmatprep.subr.mxu0 0.0
      %1253 = vmatpush1.msra.mxu0 0.0
      %1254 = vmatprep.subr.mxu0 0.0
      %1255 = vmatpush1.msra.mxu0 0.0
      %1256 = vmatprep.subr.mxu0 0.0
      %1257 = vmatpush1.msra.mxu0 0.0
      %1258 = vmatprep.subr.mxu0 0.0
      %1259 = vmatpush1.msra.mxu0 0.0
      %1260 = vmatprep.subr.mxu0 0.0
      %1261 = vmatpush1.msra.mxu0 0.0
      %1262 = vmatprep.subr.mxu0 0.0
      %1263 = vmatpush1.msra.mxu0 0.0
      %1264 = vmatprep.subr.mxu0 0.0
      %1265 = vmatpush1.msra.mxu0 0.0
      %1266 = vmatprep.subr.mxu0 0.0
      %1267 = vmatpush1.msra.mxu0 0.0
      %1268 = vmatprep.subr.mxu0 0.0
      %1269 = vmatpush1.msra.mxu0 0.0
      %1270 = vmatprep.subr.mxu0 0.0
      %1271 = vmatpush1.msra.mxu0 0.0
      %1272 = vmatprep.subr.mxu0 0.0
      %1273 = vmatpush1.msra.mxu0 0.0
      %1274 = vmatprep.subr.mxu0 0.0
      %1275 = vmatpush1.msra.mxu0 0.0
      %1276 = vmatprep.subr.mxu0 0.0
      %1277 = vmatpush1.msra.mxu0 0.0
      %1278 = vmatprep.subr.mxu0 0.0
      %1279 = vmatpush1.msra.mxu0 0.0
      %1280 = vmatprep.subr.mxu0 0.0
      %1281 = vmatpush1.msra.mxu0 0.0
      %1282 = vmatprep.subr.mxu0 0.0
      %1283 = vmatpush1.msra.mxu0 0.0
      %1284 = vmatprep.subr.mxu0 0.0
      %1285 = vmatpush1.msra.mxu0 0.0
      %1286 = vmatprep.subr.mxu0 0.0
      %1287 = vmatpush1.msra.mxu0 0.0
      %1288 = vmatprep.subr.mxu0 0.0
      %1289 = vmatpush1.msra.mxu0 0.0
      %1290 = vmatprep.subr.mxu0 0.0
      %1291 = vmatpush1.msra.mxu0 0.0
      %1292 = vmatprep.subr.mxu0 0.0
      %1293 = vmatpush1.msra.mxu0 0.0
      %1294 = vmatprep.mubr.f32.mxu0 0.0
      %1295 = vmatmul.mubr.f32.gmra.mrb[0].mxu0 %v1210
      %v1296 = vpop.f32.mrb[0].mxu0
      %v1297 = vadd.f32 %v1208, %v1296
      %v1298 = vpop.f32.mrb[0].mxu0
      %1299 = vmatprep.mubr.f32.mxu0 0.0
      %1300 = vmatmul.mubr.f32.gmra.mrb[0].mxu0 %v1213
      %v1301 = vpop.f32.mrb[0].mxu0
      %v1302 = vadd.f32 %v1208, %v1301
      %v1303 = vpop.f32.mrb[0].mxu0
      %1304 = vmatprep.mubr.f32.mxu0 0.0
      %1305 = vmatmul.mubr.f32.gmra.mrb[0].mxu0 %v1216
      %v1306 = vpop.f32.mrb[0].mxu0
      %v1307 = vadd.f32 %v1208, %v1306
      %v1308 = vpop.f32.mrb[0].mxu0
      %1309 = vmatprep.mubr.f32.mxu0 0.0
      %1310 = vmatmul.mubr.f32.gmra.mrb[0].mxu0 %v1219
      %v1311 = vpop.f32.mrb[0].mxu0
      %v1312 = vadd.f32 %v1208, %v1311
      %v1313 = vpop.f32.mrb[0].mxu0
      %1314 = vmatprep.mubr.f32.mxu0 0.0
      %1315 = vmatmul.mubr.f32.gmra.mrb[0].mxu0 %v1222
      %v1316 = vpop.f32.mrb[0].mxu0
      %v1317 = vadd.f32 %v1208, %v1316
      %v1318 = vpop.f32.mrb[0].mxu0
      %1319 = vmatprep.mubr.f32.mxu0 0.0
      %1320 = vmatmul.mubr.f32.gmra.mrb[0].mxu0 %v1225
      %v1321 = vpop.f32.mrb[0].mxu0
      %v1322 = vadd.f32 %v1208, %v1321
      %v1323 = vpop.f32.mrb[0].mxu0
      %1324 = vmatprep.mubr.f32.mxu0 0.0
      %1325 = vmatmul.mubr.f32.gmra.mrb[0].mxu0 %v1228
      %v1326 = vpop.f32.mrb[0].mxu0
      %v1327 = vadd.f32 %v1208, %v1326
      %v1328 = vpop.f32.mrb[0].mxu0
      %1329 = vdwg.mxu0
      %v1330 = vxor.u32 %v1297, 2147483648
      %v1331 = vxor.u32 %v1302, 2147483648
      %v1332 = vxor.u32 %v1307, 2147483648
      %v1333 = vxor.u32 %v1312, 2147483648
      %v1334 = vxor.u32 %v1317, 2147483648
      %v1335 = vxor.u32 %v1322, 2147483648
      %v1336 = vxor.u32 %v1327, 2147483648
      %v1337 = vmul.f32 %v1330, 1.442695
      %v1338 = vpow.pop %v1337
      %v1339 = vmul.f32 %v1331, 1.442695
      %v1340 = vpow.pop %v1339
      %v1341 = vmul.f32 %v1332, 1.442695
      %v1342 = vpow.pop %v1341
      %v1343 = vmul.f32 %v1333, 1.442695
      %v1344 = vpow.pop %v1343
      %v1345 = vmul.f32 %v1334, 1.442695
      %v1346 = vpow.pop %v1345
      %v1347 = vmul.f32 %v1335, 1.442695
      %v1348 = vpow.pop %v1347
      %v1349 = vmul.f32 %v1336, 1.442695
      %v1350 = vpow.pop %v1349
      %v1351 = vadd.f32 %v1338, 1.0
      %v1352 = vadd.f32 %v1340, 1.0
      %v1353 = vadd.f32 %v1342, 1.0
      %v1354 = vadd.f32 %v1344, 1.0
      %v1355 = vadd.f32 %v1346, 1.0
      %v1356 = vadd.f32 %v1348, 1.0
      %v1357 = vadd.f32 %v1350, 1.0
      %v1358 = vrcp.pop %v1351
      %v1359 = vmul.f32 1.0, %v1358
      %v1360 = vrcp.pop %v1352
      %v1361 = vmul.f32 1.0, %v1360
      %v1362 = vrcp.pop %v1353
      %v1363 = vmul.f32 1.0, %v1362
      %v1364 = vrcp.pop %v1354
      %v1365 = vmul.f32 1.0, %v1364
      %v1366 = vrcp.pop %v1355
      %v1367 = vmul.f32 1.0, %v1366
      %v1368 = vrcp.pop %v1356
      %v1369 = vmul.f32 1.0, %v1368
      %v1370 = vrcp.pop %v1357
      %v1371 = vmul.f32 1.0, %v1370
      %v1372 = vmul.f32 %v1297, %v1359
      %v1373 = vmul.f32 %v1302, %v1361
      %v1374 = vmul.f32 %v1307, %v1363
      %v1375 = vmul.f32 %v1312, %v1365
      %v1376 = vmul.f32 %v1317, %v1367
      %v1377 = vmul.f32 %v1322, %v1369
      %v1378 = vmul.f32 %v1327, %v1371
      %v1379 = vlaneseq
      %v1380 = vshrl.u32 %v1379, 7
      %v1381 = vsub.s32 0, %v1380
      %v1382 = vrot.slane %v468, %v1381
      %v1384 = vsel %vm490, %v1372, 0
      %v1387 = vsel %vm490, %v1373, 0
      %v1390 = vsel %vm490, %v1374, 0
      %v1393 = vsel %vm490, %v1375, 0
      %v1396 = vsel %vm490, %v1376, 0
      %v1399 = vsel %vm490, %v1377, 0
      %v1402 = vsel %vm490, %v1378, 0
      %1404 = vmatprep.subr.mxu0 0.0
      %1405 = vmatpush1.msra.mxu0 %v464
      %1406 = vmatprep.subr.mxu0 0.0
      %1407 = vmatpush1.msra.mxu0 %v465
      %1408 = vmatprep.subr.mxu0 0.0
      %1409 = vmatpush1.msra.mxu0 %v466
      %1410 = vmatprep.subr.mxu0 0.0
      %1411 = vmatpush1.msra.mxu0 %v467
      %1412 = vmatprep.subr.mxu0 0.0
      %1413 = vmatpush1.msra.mxu0 0.0
      %1414 = vmatprep.subr.mxu0 0.0
      %1415 = vmatpush1.msra.mxu0 0.0
      %1416 = vmatprep.subr.mxu0 0.0
      %1417 = vmatpush1.msra.mxu0 0.0
      %1418 = vmatprep.subr.mxu0 0.0
      %1419 = vmatpush1.msra.mxu0 0.0
      %1420 = vmatprep.subr.mxu0 0.0
      %1421 = vmatpush1.msra.mxu0 0.0
      %1422 = vmatprep.subr.mxu0 0.0
      %1423 = vmatpush1.msra.mxu0 0.0
      %1424 = vmatprep.subr.mxu0 0.0
      %1425 = vmatpush1.msra.mxu0 0.0
      %1426 = vmatprep.subr.mxu0 0.0
      %1427 = vmatpush1.msra.mxu0 0.0
      %1428 = vmatprep.subr.mxu0 0.0
      %1429 = vmatpush1.msra.mxu0 0.0
      %1430 = vmatprep.subr.mxu0 0.0
      %1431 = vmatpush1.msra.mxu0 0.0
      %1432 = vmatprep.subr.mxu0 0.0
      %1433 = vmatpush1.msra.mxu0 0.0
      %1434 = vmatprep.subr.mxu0 0.0
      %1435 = vmatpush1.msra.mxu0 0.0
      %1436 = vmatprep.subr.mxu0 0.0
      %1437 = vmatpush1.msra.mxu0 0.0
      %1438 = vmatprep.subr.mxu0 0.0
      %1439 = vmatpush1.msra.mxu0 0.0
      %1440 = vmatprep.subr.mxu0 0.0
      %1441 = vmatpush1.msra.mxu0 0.0
      %1442 = vmatprep.subr.mxu0 0.0
      %1443 = vmatpush1.msra.mxu0 0.0
      %1444 = vmatprep.subr.mxu0 0.0
      %1445 = vmatpush1.msra.mxu0 0.0
      %1446 = vmatprep.subr.mxu0 0.0
      %1447 = vmatpush1.msra.mxu0 0.0
      %1448 = vmatprep.subr.mxu0 0.0
      %1449 = vmatpush1.msra.mxu0 0.0
      %1450 = vmatprep.subr.mxu0 0.0
      %1451 = vmatpush1.msra.mxu0 0.0
      %1452 = vmatprep.subr.mxu0 0.0
      %1453 = vmatpush1.msra.mxu0 0.0
      %1454 = vmatprep.subr.mxu0 0.0
      %1455 = vmatpush1.msra.mxu0 0.0
      %1456 = vmatprep.subr.mxu0 0.0
      %1457 = vmatpush1.msra.mxu0 0.0
      %1458 = vmatprep.subr.mxu0 0.0
      %1459 = vmatpush1.msra.mxu0 0.0
      %1460 = vmatprep.subr.mxu0 0.0
      %1461 = vmatpush1.msra.mxu0 0.0
      %1462 = vmatprep.subr.mxu0 0.0
      %1463 = vmatpush1.msra.mxu0 0.0
      %1464 = vmatprep.subr.mxu0 0.0
      %1465 = vmatpush1.msra.mxu0 0.0
      %1466 = vmatprep.subr.mxu0 0.0
      %1467 = vmatpush1.msra.mxu0 0.0
      %1468 = vmatprep.mubr.f32.mxu0 0.0
      %1469 = vmatmul.mubr.f32.gmra.mrb[0].mxu0 %v1384
      %v1470 = vpop.f32.mrb[0].mxu0
      %v1471 = vadd.f32 %v1382, %v1470
      %v1472 = vpop.f32.mrb[0].mxu0
      %1473 = vmatprep.mubr.f32.mxu0 0.0
      %1474 = vmatmul.mubr.f32.gmra.mrb[0].mxu0 %v1387
      %v1475 = vpop.f32.mrb[0].mxu0
      %v1476 = vadd.f32 %v1382, %v1475
      %v1477 = vpop.f32.mrb[0].mxu0
      %1478 = vmatprep.mubr.f32.mxu0 0.0
      %1479 = vmatmul.mubr.f32.gmra.mrb[0].mxu0 %v1390
      %v1480 = vpop.f32.mrb[0].mxu0
      %v1481 = vadd.f32 %v1382, %v1480
      %v1482 = vpop.f32.mrb[0].mxu0
      %1483 = vmatprep.mubr.f32.mxu0 0.0
      %1484 = vmatmul.mubr.f32.gmra.mrb[0].mxu0 %v1393
      %v1485 = vpop.f32.mrb[0].mxu0
      %v1486 = vadd.f32 %v1382, %v1485
      %v1487 = vpop.f32.mrb[0].mxu0
      %1488 = vmatprep.mubr.f32.mxu0 0.0
      %1489 = vmatmul.mubr.f32.gmra.mrb[0].mxu0 %v1396
      %v1490 = vpop.f32.mrb[0].mxu0
      %v1491 = vadd.f32 %v1382, %v1490
      %v1492 = vpop.f32.mrb[0].mxu0
      %1493 = vmatprep.mubr.f32.mxu0 0.0
      %1494 = vmatmul.mubr.f32.gmra.mrb[0].mxu0 %v1399
      %v1495 = vpop.f32.mrb[0].mxu0
      %v1496 = vadd.f32 %v1382, %v1495
      %v1497 = vpop.f32.mrb[0].mxu0
      %1498 = vmatprep.mubr.f32.mxu0 0.0
      %1499 = vmatmul.mubr.f32.gmra.mrb[0].mxu0 %v1402
      %v1500 = vpop.f32.mrb[0].mxu0
      %v1501 = vadd.f32 %v1382, %v1500
      %v1502 = vpop.f32.mrb[0].mxu0
      %1503 = vdwg.mxu0
      %v1504 = vxor.u32 %v1471, 2147483648
      %v1505 = vxor.u32 %v1476, 2147483648
      %v1506 = vxor.u32 %v1481, 2147483648
      %v1507 = vxor.u32 %v1486, 2147483648
      %v1508 = vxor.u32 %v1491, 2147483648
      %v1509 = vxor.u32 %v1496, 2147483648
      %v1510 = vxor.u32 %v1501, 2147483648
      %v1511 = vmul.f32 %v1504, 1.442695
      %v1512 = vpow.pop %v1511
      %v1513 = vmul.f32 %v1505, 1.442695
      %v1514 = vpow.pop %v1513
      %v1515 = vmul.f32 %v1506, 1.442695
      %v1516 = vpow.pop %v1515
      %v1517 = vmul.f32 %v1507, 1.442695
      %v1518 = vpow.pop %v1517
      %v1519 = vmul.f32 %v1508, 1.442695
      %v1520 = vpow.pop %v1519
      %v1521 = vmul.f32 %v1509, 1.442695
      %v1522 = vpow.pop %v1521
      %v1523 = vmul.f32 %v1510, 1.442695
      %v1524 = vpow.pop %v1523
      %v1525 = vadd.f32 %v1512, 1.0
      %v1526 = vadd.f32 %v1514, 1.0
      %v1527 = vadd.f32 %v1516, 1.0
      %v1528 = vadd.f32 %v1518, 1.0
      %v1529 = vadd.f32 %v1520, 1.0
      %v1530 = vadd.f32 %v1522, 1.0
      %v1531 = vadd.f32 %v1524, 1.0
      %v1532 = vrcp.pop %v1525
      %v1533 = vmul.f32 1.0, %v1532
      %v1534 = vrcp.pop %v1526
      %v1535 = vmul.f32 1.0, %v1534
      %v1536 = vrcp.pop %v1527
      %v1537 = vmul.f32 1.0, %v1536
      %v1538 = vrcp.pop %v1528
      %v1539 = vmul.f32 1.0, %v1538
      %v1540 = vrcp.pop %v1529
      %v1541 = vmul.f32 1.0, %v1540
      %v1542 = vrcp.pop %v1530
      %v1543 = vmul.f32 1.0, %v1542
      %v1544 = vrcp.pop %v1531
      %v1545 = vmul.f32 1.0, %v1544
      %v1546 = vmul.f32 %v1471, %v1533
      %v1547 = vmul.f32 %v1476, %v1535
      %v1548 = vmul.f32 %v1481, %v1537
      %v1549 = vmul.f32 %v1486, %v1539
      %v1550 = vmul.f32 %v1491, %v1541
      %v1551 = vmul.f32 %v1496, %v1543
      %v1552 = vmul.f32 %v1501, %v1545
      %v1553 = vlaneseq
      %v1554 = vshrl.u32 %v1553, 7
      %v1555 = vsub.s32 0, %v1554
      %v1556 = vrot.slane %v469, %v1555
      %v1557 = vmul.f32 %v1546, %v1556
      %v1558 = vmul.f32 %v1547, %v1556
      %v1559 = vmul.f32 %v1548, %v1556
      %v1560 = vmul.f32 %v1549, %v1556
      %v1561 = vmul.f32 %v1550, %v1556
      %v1562 = vmul.f32 %v1551, %v1556
      %v1563 = vmul.f32 %v1552, %v1556
      %v1564 = vsel %vm490, %v1557, 0.0
      %1565 = vadd.xlane.f32.xlu0 %v1564
      %v1566 = vpop.xlane.xlu0 %1565
      %v1567 = vsel %vm490, %v1558, 0.0
      %1568 = vadd.xlane.f32.xlu0 %v1567
      %v1569 = vpop.xlane.xlu0 %1568
      %v1570 = vsel %vm490, %v1559, 0.0
      %1571 = vadd.xlane.f32.xlu0 %v1570
      %v1572 = vpop.xlane.xlu0 %1571
      %v1573 = vsel %vm490, %v1560, 0.0
      %1574 = vadd.xlane.f32.xlu0 %v1573
      %v1575 = vpop.xlane.xlu0 %1574
      %v1576 = vsel %vm490, %v1561, 0.0
      %1577 = vadd.xlane.f32.xlu0 %v1576
      %v1578 = vpop.xlane.xlu0 %1577
      %v1579 = vsel %vm490, %v1562, 0.0
      %1580 = vadd.xlane.f32.xlu0 %v1579
      %v1581 = vpop.xlane.xlu0 %1580
      %v1582 = vsel %vm490, %v1563, 0.0
      %1583 = vadd.xlane.f32.xlu0 %v1582
      %v1584 = vpop.xlane.xlu0 %1583
      %v1585 = vmul.f32 %v812, %v1566
      %v1586 = vmul.f32 %v814, %v1569
      %v1587 = vmul.f32 %v816, %v1572
      %v1588 = vmul.f32 %v818, %v1575
      %v1589 = vmul.f32 %v820, %v1578
      %v1590 = vmul.f32 %v822, %v1581
      %v1591 = vmul.f32 %v824, %v1584
      %1599 = vrot.lane.b32.xlu0 %v1585, 96
      %v1600 = vpop.permute.xlu0 %1599
      %1601 = vrot.lane.b32.xlu0 %v1586, 96
      %v1602 = vpop.permute.xlu0 %1601
      %1603 = vrot.lane.b32.xlu0 %v1587, 96
      %v1604 = vpop.permute.xlu0 %1603
      %1605 = vrot.lane.b32.xlu0 %v1588, 96
      %v1606 = vpop.permute.xlu0 %1605
      %1607 = vrot.lane.b32.xlu0 %v1589, 96
      %v1608 = vpop.permute.xlu0 %1607
      %1609 = vrot.lane.b32.xlu0 %v1590, 96
      %v1610 = vpop.permute.xlu0 %1609
      %1611 = vrot.lane.b32.xlu0 %v1591, 96
      %v1612 = vpop.permute.xlu0 %1611
      %1620 = vrot.lane.b32.xlu0 %v1372, 3
      %v1621 = vpop.permute.xlu0 %1620
      %1622 = vrot.lane.b32.xlu0 %v1373, 3
      %v1623 = vpop.permute.xlu0 %1622
      %1624 = vrot.lane.b32.xlu0 %v1374, 3
      %v1625 = vpop.permute.xlu0 %1624
      %1626 = vrot.lane.b32.xlu0 %v1375, 3
      %v1627 = vpop.permute.xlu0 %1626
      %1628 = vrot.lane.b32.xlu0 %v1376, 3
      %v1629 = vpop.permute.xlu0 %1628
      %1630 = vrot.lane.b32.xlu0 %v1377, 3
      %v1631 = vpop.permute.xlu0 %1630
      %1632 = vrot.lane.b32.xlu0 %v1378, 3
      %v1633 = vpop.permute.xlu0 %1632
      %v1641 = vsel %vm726, %v1600, %v1621
      %v1642 = vsel %vm726, %v1602, %v1623
      %v1643 = vsel %vm726, %v1604, %v1625
      %v1644 = vsel %vm726, %v1606, %v1627
      %v1645 = vsel %vm726, %v1608, %v1629
      %v1646 = vsel %vm726, %v1610, %v1631
      %v1647 = vsel %vm726, %v1612, %v1633
      %v1648 = vld [vmem:[%s3] sm:$0xff]
      %vm1649 = vcmask 457728
      %v1651 = vsel %vm1649, %v1648, 0
      %1653 = vmatprep.subr.mxu0 0.0
      %1654 = vmatpush1.msra.mxu0 %v1641
      %1655 = vmatprep.subr.mxu0 0.0
      %1656 = vmatpush1.msra.mxu0 %v1642
      %1657 = vmatprep.subr.mxu0 0.0
      %1658 = vmatpush1.msra.mxu0 %v1643
      %1659 = vmatprep.subr.mxu0 0.0
      %1660 = vmatpush1.msra.mxu0 %v1644
      %1661 = vmatprep.subr.mxu0 0.0
      %1662 = vmatpush1.msra.mxu0 %v1645
      %1663 = vmatprep.subr.mxu0 0.0
      %1664 = vmatpush1.msra.mxu0 %v1646
      %1665 = vmatprep.subr.mxu0 0.0
      %1666 = vmatpush1.msra.mxu0 %v1647
      %1667 = vmatprep.subr.mxu0 0.0
      %1668 = vmatpush1.msra.mxu0 0.0
      %1669 = vmatprep.subr.mxu0 0.0
      %1670 = vmatpush1.msra.mxu0 0.0
      %1671 = vmatprep.subr.mxu0 0.0
      %1672 = vmatpush1.msra.mxu0 0.0
      %1673 = vmatprep.subr.mxu0 0.0
      %1674 = vmatpush1.msra.mxu0 0.0
      %1675 = vmatprep.subr.mxu0 0.0
      %1676 = vmatpush1.msra.mxu0 0.0
      %1677 = vmatprep.subr.mxu0 0.0
      %1678 = vmatpush1.msra.mxu0 0.0
      %1679 = vmatprep.subr.mxu0 0.0
      %1680 = vmatpush1.msra.mxu0 0.0
      %1681 = vmatprep.subr.mxu0 0.0
      %1682 = vmatpush1.msra.mxu0 0.0
      %1683 = vmatprep.subr.mxu0 0.0
      %1684 = vmatpush1.msra.mxu0 0.0
      %1685 = vmatprep.subr.mxu0 0.0
      %1686 = vmatpush1.msra.mxu0 0.0
      %1687 = vmatprep.subr.mxu0 0.0
      %1688 = vmatpush1.msra.mxu0 0.0
      %1689 = vmatprep.subr.mxu0 0.0
      %1690 = vmatpush1.msra.mxu0 0.0
      %1691 = vmatprep.subr.mxu0 0.0
      %1692 = vmatpush1.msra.mxu0 0.0
      %1693 = vmatprep.subr.mxu0 0.0
      %1694 = vmatpush1.msra.mxu0 0.0
      %1695 = vmatprep.subr.mxu0 0.0
      %1696 = vmatpush1.msra.mxu0 0.0
      %1697 = vmatprep.subr.mxu0 0.0
      %1698 = vmatpush1.msra.mxu0 0.0
      %1699 = vmatprep.subr.mxu0 0.0
      %1700 = vmatpush1.msra.mxu0 0.0
      %1701 = vmatprep.subr.mxu0 0.0
      %1702 = vmatpush1.msra.mxu0 0.0
      %1703 = vmatprep.subr.mxu0 0.0
      %1704 = vmatpush1.msra.mxu0 0.0
      %1705 = vmatprep.subr.mxu0 0.0
      %1706 = vmatpush1.msra.mxu0 0.0
      %1707 = vmatprep.subr.mxu0 0.0
      %1708 = vmatpush1.msra.mxu0 0.0
      %1709 = vmatprep.subr.mxu0 0.0
      %1710 = vmatpush1.msra.mxu0 0.0
      %1711 = vmatprep.subr.mxu0 0.0
      %1712 = vmatpush1.msra.mxu0 0.0
      %1713 = vmatprep.subr.mxu0 0.0
      %1714 = vmatpush1.msra.mxu0 0.0
      %1715 = vmatprep.subr.mxu0 0.0
      %1716 = vmatpush1.msra.mxu0 0.0
      %1717 = vmatprep.mubr.f32.mxu0 0.0
      %1718 = vmatmul.mubr.f32.gmra.mrb[0].mxu0 %v1651
      %v1719 = vpop.f32.mrb[0].mxu0
      %v1720 = vadd.f32 0.0, %v1719
      %v1721 = vpop.f32.mrb[0].mxu0
      %1722 = vdwg.mxu0
      %v1723 = vadd.f32 %v485, %v1720
      %1725 = vrot.lane.b32.xlu0 %v1720, 125
      %v1726 = vpop.permute.xlu0 %1725
      %v1727 = vsel %vm490, %v1726, 0
      %1729 = vmatprep.subr.mxu0 0.0
      %1730 = vmatpush1.msra.mxu0 %v474
      %1731 = vmatprep.subr.mxu0 0.0
      %1732 = vmatpush1.msra.mxu0 %v475
      %1733 = vmatprep.subr.mxu0 0.0
      %1734 = vmatpush1.msra.mxu0 %v476
      %1735 = vmatprep.subr.mxu0 0.0
      %1736 = vmatpush1.msra.mxu0 %v477
      %1737 = vmatprep.subr.mxu0 0.0
      %1738 = vmatpush1.msra.mxu0 0.0
      %1739 = vmatprep.subr.mxu0 0.0
      %1740 = vmatpush1.msra.mxu0 0.0
      %1741 = vmatprep.subr.mxu0 0.0
      %1742 = vmatpush1.msra.mxu0 0.0
      %1743 = vmatprep.subr.mxu0 0.0
      %1744 = vmatpush1.msra.mxu0 0.0
      %1745 = vmatprep.subr.mxu0 0.0
      %1746 = vmatpush1.msra.mxu0 0.0
      %1747 = vmatprep.subr.mxu0 0.0
      %1748 = vmatpush1.msra.mxu0 0.0
      %1749 = vmatprep.subr.mxu0 0.0
      %1750 = vmatpush1.msra.mxu0 0.0
      %1751 = vmatprep.subr.mxu0 0.0
      %1752 = vmatpush1.msra.mxu0 0.0
      %1753 = vmatprep.subr.mxu0 0.0
      %1754 = vmatpush1.msra.mxu0 0.0
      %1755 = vmatprep.subr.mxu0 0.0
      %1756 = vmatpush1.msra.mxu0 0.0
      %1757 = vmatprep.subr.mxu0 0.0
      %1758 = vmatpush1.msra.mxu0 0.0
      %1759 = vmatprep.subr.mxu0 0.0
      %1760 = vmatpush1.msra.mxu0 0.0
      %1761 = vmatprep.subr.mxu0 0.0
      %1762 = vmatpush1.msra.mxu0 0.0
      %1763 = vmatprep.subr.mxu0 0.0
      %1764 = vmatpush1.msra.mxu0 0.0
      %1765 = vmatprep.subr.mxu0 0.0
      %1766 = vmatpush1.msra.mxu0 0.0
      %1767 = vmatprep.subr.mxu0 0.0
      %1768 = vmatpush1.msra.mxu0 0.0
      %1769 = vmatprep.subr.mxu0 0.0
      %1770 = vmatpush1.msra.mxu0 0.0
      %1771 = vmatprep.subr.mxu0 0.0
      %1772 = vmatpush1.msra.mxu0 0.0
      %1773 = vmatprep.subr.mxu0 0.0
      %1774 = vmatpush1.msra.mxu0 0.0
      %1775 = vmatprep.subr.mxu0 0.0
      %1776 = vmatpush1.msra.mxu0 0.0
      %1777 = vmatprep.subr.mxu0 0.0
      %1778 = vmatpush1.msra.mxu0 0.0
      %1779 = vmatprep.subr.mxu0 0.0
      %1780 = vmatpush1.msra.mxu0 0.0
      %1781 = vmatprep.subr.mxu0 0.0
      %1782 = vmatpush1.msra.mxu0 0.0
      %1783 = vmatprep.subr.mxu0 0.0
      %1784 = vmatpush1.msra.mxu0 0.0
      %1785 = vmatprep.subr.mxu0 0.0
      %1786 = vmatpush1.msra.mxu0 0.0
      %1787 = vmatprep.subr.mxu0 0.0
      %1788 = vmatpush1.msra.mxu0 0.0
      %1789 = vmatprep.subr.mxu0 0.0
      %1790 = vmatpush1.msra.mxu0 0.0
      %1791 = vmatprep.subr.mxu0 0.0
      %1792 = vmatpush1.msra.mxu0 0.0
      %1793 = vmatprep.mubr.f32.mxu0 0.0
      %1794 = vmatmul.mubr.f32.gmra.mrb[0].mxu0 %v1727
      %v1795 = vpop.f32.mrb[0].mxu0
      %v1796 = vadd.f32 0.0, %v1795
      %v1797 = vpop.f32.mrb[0].mxu0
      %1798 = vdwg.mxu0
      %v1800 = vsel %vm490, %v484, 0
      %1802 = vmatprep.subr.mxu0 0.0
      %1803 = vmatpush1.msra.mxu0 %v470
      %1804 = vmatprep.subr.mxu0 0.0
      %1805 = vmatpush1.msra.mxu0 %v471
      %1806 = vmatprep.subr.mxu0 0.0
      %1807 = vmatpush1.msra.mxu0 %v472
      %1808 = vmatprep.subr.mxu0 0.0
      %1809 = vmatpush1.msra.mxu0 %v473
      %1810 = vmatprep.subr.mxu0 0.0
      %1811 = vmatpush1.msra.mxu0 0.0
      %1812 = vmatprep.subr.mxu0 0.0
      %1813 = vmatpush1.msra.mxu0 0.0
      %1814 = vmatprep.subr.mxu0 0.0
      %1815 = vmatpush1.msra.mxu0 0.0
      %1816 = vmatprep.subr.mxu0 0.0
      %1817 = vmatpush1.msra.mxu0 0.0
      %1818 = vmatprep.subr.mxu0 0.0
      %1819 = vmatpush1.msra.mxu0 0.0
      %1820 = vmatprep.subr.mxu0 0.0
      %1821 = vmatpush1.msra.mxu0 0.0
      %1822 = vmatprep.subr.mxu0 0.0
      %1823 = vmatpush1.msra.mxu0 0.0
      %1824 = vmatprep.subr.mxu0 0.0
      %1825 = vmatpush1.msra.mxu0 0.0
      %1826 = vmatprep.subr.mxu0 0.0
      %1827 = vmatpush1.msra.mxu0 0.0
      %1828 = vmatprep.subr.mxu0 0.0
      %1829 = vmatpush1.msra.mxu0 0.0
      %1830 = vmatprep.subr.mxu0 0.0
      %1831 = vmatpush1.msra.mxu0 0.0
      %1832 = vmatprep.subr.mxu0 0.0
      %1833 = vmatpush1.msra.mxu0 0.0
      %1834 = vmatprep.subr.mxu0 0.0
      %1835 = vmatpush1.msra.mxu0 0.0
      %1836 = vmatprep.subr.mxu0 0.0
      %1837 = vmatpush1.msra.mxu0 0.0
      %1838 = vmatprep.subr.mxu0 0.0
      %1839 = vmatpush1.msra.mxu0 0.0
      %1840 = vmatprep.subr.mxu0 0.0
      %1841 = vmatpush1.msra.mxu0 0.0
      %1842 = vmatprep.subr.mxu0 0.0
      %1843 = vmatpush1.msra.mxu0 0.0
      %1844 = vmatprep.subr.mxu0 0.0
      %1845 = vmatpush1.msra.mxu0 0.0
      %1846 = vmatprep.subr.mxu0 0.0
      %1847 = vmatpush1.msra.mxu0 0.0
      %1848 = vmatprep.subr.mxu0 0.0
      %1849 = vmatpush1.msra.mxu0 0.0
      %1850 = vmatprep.subr.mxu0 0.0
      %1851 = vmatpush1.msra.mxu0 0.0
      %1852 = vmatprep.subr.mxu0 0.0
      %1853 = vmatpush1.msra.mxu0 0.0
      %1854 = vmatprep.subr.mxu0 0.0
      %1855 = vmatpush1.msra.mxu0 0.0
      %1856 = vmatprep.subr.mxu0 0.0
      %1857 = vmatpush1.msra.mxu0 0.0
      %1858 = vmatprep.subr.mxu0 0.0
      %1859 = vmatpush1.msra.mxu0 0.0
      %1860 = vmatprep.subr.mxu0 0.0
      %1861 = vmatpush1.msra.mxu0 0.0
      %1862 = vmatprep.subr.mxu0 0.0
      %1863 = vmatpush1.msra.mxu0 0.0
      %1864 = vmatprep.subr.mxu0 0.0
      %1865 = vmatpush1.msra.mxu0 0.0
      %1866 = vmatprep.mubr.f32.mxu0 0.0
      %1867 = vmatmul.mubr.f32.gmra.mrb[0].mxu0 %v1800
      %v1868 = vpop.f32.mrb[0].mxu0
      %v1869 = vadd.f32 %v1796, %v1868
      %v1870 = vpop.f32.mrb[0].mxu0
      %1871 = vdwg.mxu0
      %v1872 = vlaneseq
      %v1873 = vshrl.u32 %v1872, 7
      %v1874 = vsub.s32 0, %v1873
      %v1875 = vrot.slane %v478, %v1874
      %v1876 = vadd.f32 %v1869, %v1875
      %v1877 = vxor.u32 %v1876, 2147483648
      %v1878 = vmul.f32 %v1877, 1.442695
      %v1879 = vpow.pop %v1878
      %v1880 = vadd.f32 %v1879, 1.0
      %v1881 = vrcp.pop %v1880
      %v1882 = vmul.f32 1.0, %v1881
      %v1883 = vmul.f32 %v1876, %v1882
      %v1885 = vsel %vm490, %v1883, 0
      %1887 = vmatprep.subr.mxu0 0.0
      %1888 = vmatpush1.msra.mxu0 %v479
      %1889 = vmatprep.subr.mxu0 0.0
      %1890 = vmatpush1.msra.mxu0 %v480
      %1891 = vmatprep.subr.mxu0 0.0
      %1892 = vmatpush1.msra.mxu0 %v481
      %1893 = vmatprep.subr.mxu0 0.0
      %1894 = vmatpush1.msra.mxu0 %v482
      %1895 = vmatprep.subr.mxu0 0.0
      %1896 = vmatpush1.msra.mxu0 0.0
      %1897 = vmatprep.subr.mxu0 0.0
      %1898 = vmatpush1.msra.mxu0 0.0
      %1899 = vmatprep.subr.mxu0 0.0
      %1900 = vmatpush1.msra.mxu0 0.0
      %1901 = vmatprep.subr.mxu0 0.0
      %1902 = vmatpush1.msra.mxu0 0.0
      %1903 = vmatprep.subr.mxu0 0.0
      %1904 = vmatpush1.msra.mxu0 0.0
      %1905 = vmatprep.subr.mxu0 0.0
      %1906 = vmatpush1.msra.mxu0 0.0
      %1907 = vmatprep.subr.mxu0 0.0
      %1908 = vmatpush1.msra.mxu0 0.0
      %1909 = vmatprep.subr.mxu0 0.0
      %1910 = vmatpush1.msra.mxu0 0.0
      %1911 = vmatprep.subr.mxu0 0.0
      %1912 = vmatpush1.msra.mxu0 0.0
      %1913 = vmatprep.subr.mxu0 0.0
      %1914 = vmatpush1.msra.mxu0 0.0
      %1915 = vmatprep.subr.mxu0 0.0
      %1916 = vmatpush1.msra.mxu0 0.0
      %1917 = vmatprep.subr.mxu0 0.0
      %1918 = vmatpush1.msra.mxu0 0.0
      %1919 = vmatprep.subr.mxu0 0.0
      %1920 = vmatpush1.msra.mxu0 0.0
      %1921 = vmatprep.subr.mxu0 0.0
      %1922 = vmatpush1.msra.mxu0 0.0
      %1923 = vmatprep.subr.mxu0 0.0
      %1924 = vmatpush1.msra.mxu0 0.0
      %1925 = vmatprep.subr.mxu0 0.0
      %1926 = vmatpush1.msra.mxu0 0.0
      %1927 = vmatprep.subr.mxu0 0.0
      %1928 = vmatpush1.msra.mxu0 0.0
      %1929 = vmatprep.subr.mxu0 0.0
      %1930 = vmatpush1.msra.mxu0 0.0
      %1931 = vmatprep.subr.mxu0 0.0
      %1932 = vmatpush1.msra.mxu0 0.0
      %1933 = vmatprep.subr.mxu0 0.0
      %1934 = vmatpush1.msra.mxu0 0.0
      %1935 = vmatprep.subr.mxu0 0.0
      %1936 = vmatpush1.msra.mxu0 0.0
      %1937 = vmatprep.subr.mxu0 0.0
      %1938 = vmatpush1.msra.mxu0 0.0
      %1939 = vmatprep.subr.mxu0 0.0
      %1940 = vmatpush1.msra.mxu0 0.0
      %1941 = vmatprep.subr.mxu0 0.0
      %1942 = vmatpush1.msra.mxu0 0.0
      %1943 = vmatprep.subr.mxu0 0.0
      %1944 = vmatpush1.msra.mxu0 0.0
      %1945 = vmatprep.subr.mxu0 0.0
      %1946 = vmatpush1.msra.mxu0 0.0
      %1947 = vmatprep.subr.mxu0 0.0
      %1948 = vmatpush1.msra.mxu0 0.0
      %1949 = vmatprep.subr.mxu0 0.0
      %1950 = vmatpush1.msra.mxu0 0.0
      %1951 = vmatprep.mubr.f32.mxu0 0.0
      %1952 = vmatmul.mubr.f32.gmra.mrb[0].mxu0 %v1885
      %v1953 = vpop.f32.mrb[0].mxu0
      %v1954 = vadd.f32 0.0, %v1953
      %v1955 = vpop.f32.mrb[0].mxu0
      %1956 = vdwg.mxu0
      %v1957 = vadd.f32 %v484, %v1954
      %v1958 = vlaneseq
      %v1959 = vshrl.u32 %v1958, 7
      %v1960 = vsub.s32 0, %v1959
      %v1961 = vrot.slane %v483, %v1960
      %v1962 = vadd.f32 %v1957, %v1961
      %1963 = vst.msk [vmem:[#allocation2] sm:$0xff] %vm490, %v1962
      %1964 = vst.msk [vmem:[#allocation3] sm:$0xff] %vm726, %v1723
      %p1965 = scmp.eq.s32.totalorder %s23, 3
      // Predicated region
      $region65: #{tpu_custom_call.1} parent=59 // pred_check
        %p1966 = pneg %p1965
      $region66: #{tpu_custom_call.1} parent=59 // pred_check_branch
        %1968 = sbr.rel (%p1966) target = $region68
      $region67: #{tpu_custom_call.1} parent=59 // pred_region
        %v1969 = vld [vmem:[%s7] sm:$0xff]
        %v1970 = vld [vmem:[%s7 + $0x8] sm:$0xff]
        %v1971 = vld [vmem:[%s7 + $0x10] sm:$0xff]
        %v1972 = vld [vmem:[%s7 + $0x18] sm:$0xff]
        %v1973 = vld [vmem:[%s8] sm:$0x1]
        %v1975 = vlaneseq
        %v1976 = vshrl.u32 %v1975, 7
        %v1977 = vsub.s32 0, %v1976
        %v1978 = vrot.slane %v1973, %v1977
        %v1981 = vsel %vm490, %v1962, 0
        %1983 = vmatprep.subr.mxu0 0.0
        %1984 = vmatpush1.msra.mxu0 %v1969
        %1985 = vmatprep.subr.mxu0 0.0
        %1986 = vmatpush1.msra.mxu0 %v1970
        %1987 = vmatprep.subr.mxu0 0.0
        %1988 = vmatpush1.msra.mxu0 %v1971
        %1989 = vmatprep.subr.mxu0 0.0
        %1990 = vmatpush1.msra.mxu0 %v1972
        %1991 = vmatprep.subr.mxu0 0.0
        %1992 = vmatpush1.msra.mxu0 0.0
        %1993 = vmatprep.subr.mxu0 0.0
        %1994 = vmatpush1.msra.mxu0 0.0
        %1995 = vmatprep.subr.mxu0 0.0
        %1996 = vmatpush1.msra.mxu0 0.0
        %1997 = vmatprep.subr.mxu0 0.0
        %1998 = vmatpush1.msra.mxu0 0.0
        %1999 = vmatprep.subr.mxu0 0.0
        %2000 = vmatpush1.msra.mxu0 0.0
        %2001 = vmatprep.subr.mxu0 0.0
        %2002 = vmatpush1.msra.mxu0 0.0
        %2003 = vmatprep.subr.mxu0 0.0
        %2004 = vmatpush1.msra.mxu0 0.0
        %2005 = vmatprep.subr.mxu0 0.0
        %2006 = vmatpush1.msra.mxu0 0.0
        %2007 = vmatprep.subr.mxu0 0.0
        %2008 = vmatpush1.msra.mxu0 0.0
        %2009 = vmatprep.subr.mxu0 0.0
        %2010 = vmatpush1.msra.mxu0 0.0
        %2011 = vmatprep.subr.mxu0 0.0
        %2012 = vmatpush1.msra.mxu0 0.0
        %2013 = vmatprep.subr.mxu0 0.0
        %2014 = vmatpush1.msra.mxu0 0.0
        %2015 = vmatprep.subr.mxu0 0.0
        %2016 = vmatpush1.msra.mxu0 0.0
        %2017 = vmatprep.subr.mxu0 0.0
        %2018 = vmatpush1.msra.mxu0 0.0
        %2019 = vmatprep.subr.mxu0 0.0
        %2020 = vmatpush1.msra.mxu0 0.0
        %2021 = vmatprep.subr.mxu0 0.0
        %2022 = vmatpush1.msra.mxu0 0.0
        %2023 = vmatprep.subr.mxu0 0.0
        %2024 = vmatpush1.msra.mxu0 0.0
        %2025 = vmatprep.subr.mxu0 0.0
        %2026 = vmatpush1.msra.mxu0 0.0
        %2027 = vmatprep.subr.mxu0 0.0
        %2028 = vmatpush1.msra.mxu0 0.0
        %2029 = vmatprep.subr.mxu0 0.0
        %2030 = vmatpush1.msra.mxu0 0.0
        %2031 = vmatprep.subr.mxu0 0.0
        %2032 = vmatpush1.msra.mxu0 0.0
        %2033 = vmatprep.subr.mxu0 0.0
        %2034 = vmatpush1.msra.mxu0 0.0
        %2035 = vmatprep.subr.mxu0 0.0
        %2036 = vmatpush1.msra.mxu0 0.0
        %2037 = vmatprep.subr.mxu0 0.0
        %2038 = vmatpush1.msra.mxu0 0.0
        %2039 = vmatprep.subr.mxu0 0.0
        %2040 = vmatpush1.msra.mxu0 0.0
        %2041 = vmatprep.subr.mxu0 0.0
        %2042 = vmatpush1.msra.mxu0 0.0
        %2043 = vmatprep.subr.mxu0 0.0
        %2044 = vmatpush1.msra.mxu0 0.0
        %2045 = vmatprep.subr.mxu0 0.0
        %2046 = vmatpush1.msra.mxu0 0.0
        %2047 = vmatprep.mubr.f32.mxu0 0.0
        %2048 = vmatmul.mubr.f32.gmra.mrb[0].mxu0 %v1981
        %v2049 = vpop.f32.mrb[0].mxu0
        %v2050 = vadd.f32 %v1978, %v2049
        %v2051 = vpop.f32.mrb[0].mxu0
        %2052 = vdwg.mxu0
        %vm2053 = vcmask 31744
        %2054 = vst.msk [vmem:[%s10] sm:$0xff] %vm2053, %v2050
        %2055 = vst.msk [vmem:[%s11] sm:$0xff] %vm726, %v1723
      $region68: #{tpu_custom_call.1} parent=59 // pred_fallthru
        _
      // Predicated region
      $region69: #{tpu_custom_call.1} parent=59 // pred_check
        %p2056 = pneg %p246
      $region70: #{tpu_custom_call.1} parent=59 // pred_check_branch
        %2058 = sbr.rel (%p2056) target = $region72
      $region71: #{tpu_custom_call.1} parent=59 // pred_region
        _
      $region72: #{tpu_custom_call.1} parent=59 // pred_fallthru
        _
      // Predicated region
      $region73: #{tpu_custom_call.1} parent=59 // pred_check
        %p2059 = pneg %p267
      $region74: #{tpu_custom_call.1} parent=59 // pred_check_branch
        %2061 = sbr.rel (%p2059) target = $region76
      $region75: #{tpu_custom_call.1} parent=59 // pred_region
        _
      $region76: #{tpu_custom_call.1} parent=59 // pred_fallthru
        _
      // Predicated region
      $region77: #{tpu_custom_call.1} parent=59 // pred_check
        %p2062 = pneg %p246
      $region78: #{tpu_custom_call.1} parent=59 // pred_check_branch
        %2064 = sbr.rel (%p2062) target = $region80
      $region79: #{tpu_custom_call.1} parent=59 // pred_region
        _
      $region80: #{tpu_custom_call.1} parent=59 // pred_fallthru
        _
      // Predicated region
      $region81: #{tpu_custom_call.1} parent=59 // pred_check
        %p2065 = pneg %p267
      $region82: #{tpu_custom_call.1} parent=59 // pred_check_branch
        %2067 = sbr.rel (%p2065) target = $region84
      $region83: #{tpu_custom_call.1} parent=59 // pred_region
        _
      $region84: #{tpu_custom_call.1} parent=59 // pred_fallthru
        _
    $region60: #{tpu_custom_call.1} parent=5 // pred_fallthru
      _
    %p2068 = scmp.le.s32.totalorder 2, %s18
    // Predicated region
    $region85: #{tpu_custom_call.1} parent=5 // pred_check
      %p2069 = pneg %p2068
    $region86: #{tpu_custom_call.1} parent=5 // pred_check_branch
      %2071 = sbr.rel (%p2069) target = $region88
    $region87: #{tpu_custom_call.1} parent=5 // pred_region
      %s2072 = ssub.s32 %s18, 2
    $region88: #{tpu_custom_call.1} parent=5 // pred_fallthru
      _
  $region6: #{tpu_custom_call.1} parent=0 // loop_footer
    %s22 = sadd.s32 1, %s18
  $region7: #{tpu_custom_call.1} parent=0 // loop_footer_branch
    %17 = sbr.rel target = $region3
  $region8: #{tpu_custom_call.1} parent=0 // loop_exit
    _

</llo_original>
